<compile_context>
chip_gen: v5e
topology: v5e:2x2
jax: 0.10.0
libtpu: 0.0.40
codegen_flags: <defaults>
</compile_context>

<pallas_src>
import functools

import jax
import jax.numpy as jnp
from jax import lax
from jax.experimental import pallas as pl
from jax.experimental.pallas import tpu as pltpu


def _encoder_kernel(x_ref,        # (Tm1, TB, I)   time-major X, one batch block
                    ex_ref,       # (TB, I)        hoisted sum_t X*wa_x + attn bias
                    w_ref,        # (H+I, 4H)      stacked [w_hh^T ; w_ih^T]
                    b_ref,        # (1, 4H)        b_ih + b_hh
                    wah_ref,      # (1, H)         attn weight, h_n part
                    was_ref,      # (1, H)         attn weight, s_n part
                    x_tilde_ref,  # out (Tm1, TB, I)
                    x_enc_ref,    # out (Tm1, TB, H)
                    hx_scr,       # scratch (TB, H+I): [h | x_tilde]
                    c_scr):       # scratch (TB, H):  cell state s_n
    Tm1, TB, I = x_ref.shape
    H = c_scr.shape[1]

    # _init_states: zero hidden / cell state (h lives in hx_scr[:, :H]).
    hx_scr[...] = jnp.zeros_like(hx_scr)
    c_scr[...] = jnp.zeros_like(c_scr)

    e_x = ex_ref[...]          # (TB, I)  loop-invariant attention term (+ bias)
    w = w_ref[...]             # (H+I, 4H)
    bias = b_ref[...]          # (1, 4H)
    wah = wah_ref[...]         # (1, H)
    was = was_ref[...]         # (1, H)

    def step(t, carry):
        h = hx_scr[:, 0:H]     # (TB, H)  lane-aligned slice (offset 0)
        c = c_scr[...]         # (TB, H)

        # ---- input attention (VPU mul + XLU row reduce; no skinny matmuls) ----
        e_hs = jnp.sum(h * wah + c * was, axis=1, keepdims=True)   # (TB, 1)
        e = e_x + e_hs                                             # (TB, I)
        e_max = jnp.max(e, axis=1, keepdims=True)
        p = jnp.exp(e - e_max)
        denom = jnp.sum(p, axis=1, keepdims=True)
        alpha = p * pl.reciprocal(denom, approx=True)              # (TB, I)
        x_tilde = alpha * x_ref[t]                                 # (TB, I)

        # ---- one LSTM step, fused gate matmul (single MXU push) ---------------
        hx_scr[:, H:H + I] = x_tilde
        gates = jnp.dot(hx_scr[...], w,
                        preferred_element_type=jnp.float32) + bias  # (TB, 4H)
        sg = jax.nn.sigmoid(gates)      # full-width EUP
        tg = jnp.tanh(gates)            # full-width EUP
        i_g = sg[:, 0 * H:1 * H]
        f_g = sg[:, 1 * H:2 * H]
        g_g = tg[:, 2 * H:3 * H]
        o_g = sg[:, 3 * H:4 * H]
        c_new = f_g * c + i_g * g_g
        h_new = o_g * jnp.tanh(c_new)

        hx_scr[:, 0:H] = h_new
        c_scr[...] = c_new
        x_tilde_ref[t] = x_tilde
        x_enc_ref[t] = h_new
        return carry

    lax.fori_loop(0, Tm1, step, 0, unroll=True)


def encoder_forward(X, params, *, encoder_num_hidden, batch_block=8):
    """X: (batch, T-1, input_size) float32 -> (X_tilde, X_encoded)."""
    B, Tm1, I = X.shape
    H = encoder_num_hidden
    X = X.astype(jnp.float32)

    # Pad batch to a multiple of the batch block (>=8 fills f32 sublanes).
    TB = batch_block
    B_pad = ((B + TB - 1) // TB) * TB
    if B_pad != B:
        X = jnp.pad(X, ((0, B_pad - B), (0, 0), (0, 0)))

    # ---- parameter prep (wrapper-side, tiny) --------------------------------
    w_ih_t = params["w_ih"].T.astype(jnp.float32)          # (I, 4H)
    w_hh_t = params["w_hh"].T.astype(jnp.float32)          # (H, 4H)
    w_stacked = jnp.concatenate([w_hh_t, w_ih_t], axis=0)  # (H+I, 4H), [h | x] order
    b = (params["b_ih"] + params["b_hh"]).reshape(1, 4 * H).astype(jnp.float32)
    wa = params["wa"].reshape(-1).astype(jnp.float32)      # (2H + T-1,)
    wa_h = wa[:H].reshape(1, H)
    wa_s = wa[H:2 * H].reshape(1, H)
    wa_x = wa[2 * H:]                                      # (Tm1,)
    ba = params["ba"].reshape(()).astype(jnp.float32)

    # Hoisted loop-invariant attention term: e_x[b,i] = sum_t X[b,t,i]*wa_x[t] + ba
    e_x = jnp.einsum("bti,t->bi", X, wa_x) + ba            # (B_pad, I)

    x_tm = jnp.transpose(X, (1, 0, 2))                     # (Tm1, B_pad, I)

    grid_spec = pltpu.PrefetchScalarGridSpec(
        num_scalar_prefetch=0,
        grid=(B_pad // TB,),                               # independent batch blocks
        in_specs=[
            pl.BlockSpec((Tm1, TB, I), lambda b: (0, b, 0)),
            pl.BlockSpec((TB, I), lambda b: (b, 0)),
            pl.BlockSpec((H + I, 4 * H), lambda b: (0, 0)),
            pl.BlockSpec((1, 4 * H), lambda b: (0, 0)),
            pl.BlockSpec((1, H), lambda b: (0, 0)),
            pl.BlockSpec((1, H), lambda b: (0, 0)),
        ],
        out_specs=[
            pl.BlockSpec((Tm1, TB, I), lambda b: (0, b, 0)),
            pl.BlockSpec((Tm1, TB, H), lambda b: (0, b, 0)),
        ],
        scratch_shapes=[pltpu.VMEM((TB, H + I), jnp.float32),   # [h | x_tilde]
                        pltpu.VMEM((TB, H), jnp.float32)],      # cell state
    )

    x_tilde_tm, x_enc_tm = pl.pallas_call(
        _encoder_kernel,
        out_shape=(jax.ShapeDtypeStruct((Tm1, B_pad, I), jnp.float32),
                   jax.ShapeDtypeStruct((Tm1, B_pad, H), jnp.float32)),
        grid_spec=grid_spec,
        compiler_params=pltpu.CompilerParams(
            dimension_semantics=("parallel",)),    # batch blocks are independent
    )(x_tm, e_x, w_stacked, b, wa_h, wa_s)

    X_tilde = jnp.transpose(x_tilde_tm, (1, 0, 2))[:B]     # (B, T-1, I)
    X_encoded = jnp.transpose(x_enc_tm, (1, 0, 2))[:B]     # (B, T-1, H)
    return X_tilde, X_encoded


def init_params(key, T, input_size, hidden):
    """Deterministic synthetic parameters matching nn.LSTM / nn.Linear shapes."""
    Tm1 = T - 1
    k = hidden ** -0.5
    ks = jax.random.split(key, 6)
    w_ih = jax.random.uniform(ks[0], (4 * hidden, input_size), jnp.float32, -k, k)
    w_hh = jax.random.uniform(ks[1], (4 * hidden, hidden), jnp.float32, -k, k)
    b_ih = jax.random.uniform(ks[2], (4 * hidden,), jnp.float32, -k, k)
    b_hh = jax.random.uniform(ks[3], (4 * hidden,), jnp.float32, -k, k)
    fan_in = 2 * hidden + Tm1
    ka = fan_in ** -0.5
    wa = jax.random.uniform(ks[4], (1, fan_in), jnp.float32, -ka, ka)
    ba = jax.random.uniform(ks[5], (1,), jnp.float32, -ka, ka)
    return dict(w_ih=w_ih, w_hh=w_hh, b_ih=b_ih, b_hh=b_hh, wa=wa, ba=ba)


def encoder_ref(X, params, H):
    """Pure-JAX reference mirroring the PyTorch forward exactly."""
    B, Tm1, I = X.shape
    wa = params["wa"].reshape(-1)
    wa_h, wa_s, wa_x = wa[:H], wa[H:2 * H], wa[2 * H:]
    ba = params["ba"][0]
    h = jnp.zeros((B, H), jnp.float32)
    c = jnp.zeros((B, H), jnp.float32)
    xt_list, xe_list = [], []
    for t in range(Tm1):
        e = (jnp.einsum("bki,k->bi", X, wa_x)
             + (h @ wa_h)[:, None] + (c @ wa_s)[:, None] + ba)
        alpha = jax.nn.softmax(e, axis=1)
        x_tilde = alpha * X[:, t, :]
        gates = (x_tilde @ params["w_ih"].T + h @ params["w_hh"].T
                 + params["b_ih"] + params["b_hh"])
        i_g = jax.nn.sigmoid(gates[:, :H])
        f_g = jax.nn.sigmoid(gates[:, H:2 * H])
        g_g = jnp.tanh(gates[:, 2 * H:3 * H])
        o_g = jax.nn.sigmoid(gates[:, 3 * H:])
        c = f_g * c + i_g * g_g
        h = o_g * jnp.tanh(c)
        xt_list.append(x_tilde)
        xe_list.append(h)
    return jnp.stack(xt_list, axis=1), jnp.stack(xe_list, axis=1)


if __name__ == "__main__":
    # batch=8 fills all f32 sublanes; X: (batch, T-1, input_size)
    T, input_size, hidden, batch = 9, 8, 32, 8
    key = jax.random.PRNGKey(0)
    kx, kp = jax.random.split(key)
    X = jax.random.normal(kx, (batch, T - 1, input_size), jnp.float32)
    params = init_params(kp, T, input_size, hidden)

    fwd = jax.jit(functools.partial(encoder_forward, encoder_num_hidden=hidden))
    X_tilde, X_encoded = fwd(X, params)
    jax.block_until_ready((X_tilde, X_encoded))

    Xt_ref, Xe_ref = encoder_ref(X, params, hidden)
    assert X_tilde.shape == (batch, T - 1, input_size)
    assert X_encoded.shape == (batch, T - 1, hidden)
    # Slightly relaxed tolerance: softmax denominator uses the EUP approximate
    # reciprocal (pl.reciprocal(approx=True)).
    assert jnp.allclose(X_tilde, Xt_ref, rtol=2e-3, atol=2e-3), "X_tilde mismatch"
    assert jnp.allclose(X_encoded, Xe_ref, rtol=2e-3, atol=2e-3), "X_encoded mismatch"
    print("KERNEL_OK")
</pallas_src>

<mosaic_0001>
module attributes {stable_mosaic.version = 11 : i64} {
  func.func @_encoder_kernel(%arg0: i32, %arg1: memref<8x8x8xf32, #tpu.memory_space<vmem>>, %arg2: memref<8x8xf32, #tpu.memory_space<vmem>>, %arg3: memref<40x128xf32, #tpu.memory_space<vmem>>, %arg4: memref<1x128xf32, #tpu.memory_space<vmem>>, %arg5: memref<1x32xf32, #tpu.memory_space<vmem>>, %arg6: memref<1x32xf32, #tpu.memory_space<vmem>>, %arg7: memref<8x8x8xf32, #tpu.memory_space<vmem>>, %arg8: memref<8x8x32xf32, #tpu.memory_space<vmem>>, %arg9: memref<8x40xf32, #tpu.memory_space<vmem>>, %arg10: memref<8x32xf32, #tpu.memory_space<vmem>>) attributes {dimension_semantics = [#tpu.dimension_semantics<parallel>], iteration_bounds = array<i64: 1>, scalar_prefetch = 0 : i64, scratch_operands = 2 : i64, tpu.core_type = #tpu.core_type<tc>, window_params = [{transform_indices = @transform_0, window_bounds = array<i64: 8, 8, 8>}, {transform_indices = @transform_1, window_bounds = array<i64: 8, 8>}, {pipeline_mode = #tpu.pipeline_mode<synchronous>, transform_indices = @transform_2, window_bounds = array<i64: 40, 128>}, {pipeline_mode = #tpu.pipeline_mode<synchronous>, transform_indices = @transform_3, window_bounds = array<i64: 1, 128>}, {pipeline_mode = #tpu.pipeline_mode<synchronous>, transform_indices = @transform_4, window_bounds = array<i64: 1, 32>}, {pipeline_mode = #tpu.pipeline_mode<synchronous>, transform_indices = @transform_5, window_bounds = array<i64: 1, 32>}, {transform_indices = @transform_6, window_bounds = array<i64: 8, 8, 8>}, {transform_indices = @transform_7, window_bounds = array<i64: 8, 8, 32>}]} {
    %cst = arith.constant 0.000000e+00 : f32
    %0 = vector.broadcast %cst : f32 to vector<8x40xf32>
    %c0 = arith.constant 0 : index
    %c0_0 = arith.constant 0 : index
    %1 = vector.load %arg9[%c0, %c0_0] : memref<8x40xf32, #tpu.memory_space<vmem>>, vector<8x40xf32>
    tpu.vector_store %arg9[%c0, %c0_0], %0 {strides = array<i32>} : memref<8x40xf32, #tpu.memory_space<vmem>>, vector<8x40xf32>,
    %cst_1 = arith.constant 0.000000e+00 : f32
    %2 = vector.broadcast %cst_1 : f32 to vector<8x32xf32>
    %c0_2 = arith.constant 0 : index
    %c0_3 = arith.constant 0 : index
    %3 = vector.load %arg10[%c0_2, %c0_3] : memref<8x32xf32, #tpu.memory_space<vmem>>, vector<8x32xf32>
    tpu.vector_store %arg10[%c0_2, %c0_3], %2 {strides = array<i32>} : memref<8x32xf32, #tpu.memory_space<vmem>>, vector<8x32xf32>,
    %c0_4 = arith.constant 0 : index
    %c0_5 = arith.constant 0 : index
    %4 = vector.load %arg2[%c0_4, %c0_5] : memref<8x8xf32, #tpu.memory_space<vmem>>, vector<8x8xf32>
    %c0_6 = arith.constant 0 : index
    %c0_7 = arith.constant 0 : index
    %5 = vector.load %arg3[%c0_6, %c0_7] : memref<40x128xf32, #tpu.memory_space<vmem>>, vector<40x128xf32>
    %c0_8 = arith.constant 0 : index
    %c0_9 = arith.constant 0 : index
    %6 = vector.load %arg4[%c0_8, %c0_9] : memref<1x128xf32, #tpu.memory_space<vmem>>, vector<1x128xf32>
    %c0_10 = arith.constant 0 : index
    %c0_11 = arith.constant 0 : index
    %7 = vector.load %arg5[%c0_10, %c0_11] : memref<1x32xf32, #tpu.memory_space<vmem>>, vector<1x32xf32>
    %c0_12 = arith.constant 0 : index
    %c0_13 = arith.constant 0 : index
    %8 = vector.load %arg6[%c0_12, %c0_13] : memref<1x32xf32, #tpu.memory_space<vmem>>, vector<1x32xf32>
    %c0_i32 = arith.constant 0 : i32
    %c0_14 = arith.constant 0 : index
    %c0_15 = arith.constant 0 : index
    %9 = vector.load %arg9[%c0_14, %c0_15] : memref<8x40xf32, #tpu.memory_space<vmem>>, vector<8x32xf32>
    %c0_16 = arith.constant 0 : index
    %c0_17 = arith.constant 0 : index
    %10 = vector.load %arg10[%c0_16, %c0_17] : memref<8x32xf32, #tpu.memory_space<vmem>>, vector<8x32xf32>
    %11 = vector.broadcast %7 : vector<1x32xf32> to vector<8x32xf32>
    %12 = arith.mulf %9, %11 : vector<8x32xf32>
    %13 = vector.broadcast %8 : vector<1x32xf32> to vector<8x32xf32>
    %14 = arith.mulf %10, %13 : vector<8x32xf32>
    %15 = arith.addf %12, %14 : vector<8x32xf32>
    %cst_18 = arith.constant dense<0.000000e+00> : vector<8xf32>
    %16 = vector.multi_reduction <add>, %15, %cst_18 [1] : vector<8x32xf32> to vector<8xf32>
    %17 = vector.shape_cast %16 : vector<8xf32> to vector<8x1xf32>
    %18 = vector.broadcast %17 : vector<8x1xf32> to vector<8x8xf32>
    %19 = arith.addf %4, %18 : vector<8x8xf32>
    %cst_19 = arith.constant dense<0xFF800000> : vector<8xf32>
    %20 = vector.multi_reduction <maximumf>, %19, %cst_19 [1] : vector<8x8xf32> to vector<8xf32>
    %21 = vector.shape_cast %20 : vector<8xf32> to vector<8x1xf32>
    %22 = vector.broadcast %21 : vector<8x1xf32> to vector<8x8xf32>
    %23 = arith.subf %19, %22 : vector<8x8xf32>
    %24 = math.exp %23 : vector<8x8xf32>
    %cst_20 = arith.constant dense<0.000000e+00> : vector<8xf32>
    %25 = vector.multi_reduction <add>, %24, %cst_20 [1] : vector<8x8xf32> to vector<8xf32>
    %26 = vector.shape_cast %25 : vector<8xf32> to vector<8x1xf32>
    %27 = tpu.reciprocal %26 {approx = true} : vector<8x1xf32> -> vector<8x1xf32>
    %28 = vector.broadcast %27 : vector<8x1xf32> to vector<8x8xf32>
    %29 = arith.mulf %24, %28 : vector<8x8xf32>
    %30 = arith.index_cast %c0_i32 : i32 to index
    %c0_21 = arith.constant 0 : index
    %c0_22 = arith.constant 0 : index
    %31 = vector.load %arg1[%30, %c0_21, %c0_22] : memref<8x8x8xf32, #tpu.memory_space<vmem>>, vector<1x8x8xf32>
    %32 = vector.shape_cast %31 : vector<1x8x8xf32> to vector<8x8xf32>
    %33 = arith.mulf %29, %32 : vector<8x8xf32>
    %c0_23 = arith.constant 0 : index
    %c32 = arith.constant 32 : index
    %34 = vector.load %arg9[%c0_23, %c32] : memref<8x40xf32, #tpu.memory_space<vmem>>, vector<8x8xf32>
    tpu.vector_store %arg9[%c0_23, %c32], %33 {strides = array<i32>} : memref<8x40xf32, #tpu.memory_space<vmem>>, vector<8x8xf32>,
    %c0_24 = arith.constant 0 : index
    %c0_25 = arith.constant 0 : index
    %35 = vector.load %arg9[%c0_24, %c0_25] : memref<8x40xf32, #tpu.memory_space<vmem>>, vector<8x40xf32>
    %cst_26 = arith.constant dense<0.000000e+00> : vector<8x128xf32>
    %36 = tpu.matmul %35, %5, %cst_26 {dimension_numbers = #tpu.dot_dimension_numbers<[1], [0], [0], [1], [0, 0, 1, 1], [], []>} : vector<8x40xf32>, vector<40x128xf32>, vector<8x128xf32> -> vector<8x128xf32>
    %37 = vector.broadcast %6 : vector<1x128xf32> to vector<8x128xf32>
    %38 = arith.addf %36, %37 : vector<8x128xf32>
    %39 = arith.negf %38 : vector<8x128xf32>
    %40 = math.exp %39 : vector<8x128xf32>
    %cst_27 = arith.constant 1.000000e+00 : f32
    %41 = vector.broadcast %cst_27 : f32 to vector<8x128xf32>
    %42 = arith.addf %41, %40 : vector<8x128xf32>
    %43 = arith.divf %41, %42 : vector<8x128xf32>
    %44 = math.tanh %38 : vector<8x128xf32>
    %45 = vector.extract_strided_slice %43 {offsets = [0, 0], sizes = [8, 32], strides = [1, 1]} : vector<8x128xf32> to vector<8x32xf32>
    %46 = vector.extract_strided_slice %43 {offsets = [0, 32], sizes = [8, 32], strides = [1, 1]} : vector<8x128xf32> to vector<8x32xf32>
    %47 = vector.extract_strided_slice %44 {offsets = [0, 64], sizes = [8, 32], strides = [1, 1]} : vector<8x128xf32> to vector<8x32xf32>
    %48 = vector.extract_strided_slice %43 {offsets = [0, 96], sizes = [8, 32], strides = [1, 1]} : vector<8x128xf32> to vector<8x32xf32>
    %49 = arith.mulf %46, %10 : vector<8x32xf32>
    %50 = arith.mulf %45, %47 : vector<8x32xf32>
    %51 = arith.addf %49, %50 : vector<8x32xf32>
    %52 = math.tanh %51 : vector<8x32xf32>
    %53 = arith.mulf %48, %52 : vector<8x32xf32>
    %c0_28 = arith.constant 0 : index
    %c0_29 = arith.constant 0 : index
    %54 = vector.load %arg9[%c0_28, %c0_29] : memref<8x40xf32, #tpu.memory_space<vmem>>, vector<8x32xf32>
    tpu.vector_store %arg9[%c0_28, %c0_29], %53 {strides = array<i32>} : memref<8x40xf32, #tpu.memory_space<vmem>>, vector<8x32xf32>,
    %c0_30 = arith.constant 0 : index
    %c0_31 = arith.constant 0 : index
    %55 = vector.load %arg10[%c0_30, %c0_31] : memref<8x32xf32, #tpu.memory_space<vmem>>, vector<8x32xf32>
    tpu.vector_store %arg10[%c0_30, %c0_31], %51 {strides = array<i32>} : memref<8x32xf32, #tpu.memory_space<vmem>>, vector<8x32xf32>,
    %56 = arith.index_cast %c0_i32 : i32 to index
    %c0_32 = arith.constant 0 : index
    %c0_33 = arith.constant 0 : index
    %57 = vector.load %arg7[%56, %c0_32, %c0_33] : memref<8x8x8xf32, #tpu.memory_space<vmem>>, vector<1x8x8xf32>
    %58 = vector.shape_cast %57 : vector<1x8x8xf32> to vector<8x8xf32>
    %59 = vector.shape_cast %33 : vector<8x8xf32> to vector<1x8x8xf32>
    tpu.vector_store %arg7[%56, %c0_32, %c0_33], %59 {strides = array<i32>} : memref<8x8x8xf32, #tpu.memory_space<vmem>>, vector<1x8x8xf32>,
    %60 = arith.index_cast %c0_i32 : i32 to index
    %c0_34 = arith.constant 0 : index
    %c0_35 = arith.constant 0 : index
    %61 = vector.load %arg8[%60, %c0_34, %c0_35] : memref<8x8x32xf32, #tpu.memory_space<vmem>>, vector<1x8x32xf32>
    %62 = vector.shape_cast %61 : vector<1x8x32xf32> to vector<8x32xf32>
    %63 = vector.shape_cast %53 : vector<8x32xf32> to vector<1x8x32xf32>
    tpu.vector_store %arg8[%60, %c0_34, %c0_35], %63 {strides = array<i32>} : memref<8x8x32xf32, #tpu.memory_space<vmem>>, vector<1x8x32xf32>,
    %c1_i32 = arith.constant 1 : i32
    %c0_36 = arith.constant 0 : index
    %c0_37 = arith.constant 0 : index
    %64 = vector.load %arg9[%c0_36, %c0_37] : memref<8x40xf32, #tpu.memory_space<vmem>>, vector<8x32xf32>
    %c0_38 = arith.constant 0 : index
    %c0_39 = arith.constant 0 : index
    %65 = vector.load %arg10[%c0_38, %c0_39] : memref<8x32xf32, #tpu.memory_space<vmem>>, vector<8x32xf32>
    %66 = vector.broadcast %7 : vector<1x32xf32> to vector<8x32xf32>
    %67 = arith.mulf %64, %66 : vector<8x32xf32>
    %68 = vector.broadcast %8 : vector<1x32xf32> to vector<8x32xf32>
    %69 = arith.mulf %65, %68 : vector<8x32xf32>
    %70 = arith.addf %67, %69 : vector<8x32xf32>
    %cst_40 = arith.constant dense<0.000000e+00> : vector<8xf32>
    %71 = vector.multi_reduction <add>, %70, %cst_40 [1] : vector<8x32xf32> to vector<8xf32>
    %72 = vector.shape_cast %71 : vector<8xf32> to vector<8x1xf32>
    %73 = vector.broadcast %72 : vector<8x1xf32> to vector<8x8xf32>
    %74 = arith.addf %4, %73 : vector<8x8xf32>
    %cst_41 = arith.constant dense<0xFF800000> : vector<8xf32>
    %75 = vector.multi_reduction <maximumf>, %74, %cst_41 [1] : vector<8x8xf32> to vector<8xf32>
    %76 = vector.shape_cast %75 : vector<8xf32> to vector<8x1xf32>
    %77 = vector.broadcast %76 : vector<8x1xf32> to vector<8x8xf32>
    %78 = arith.subf %74, %77 : vector<8x8xf32>
    %79 = math.exp %78 : vector<8x8xf32>
    %cst_42 = arith.constant dense<0.000000e+00> : vector<8xf32>
    %80 = vector.multi_reduction <add>, %79, %cst_42 [1] : vector<8x8xf32> to vector<8xf32>
    %81 = vector.shape_cast %80 : vector<8xf32> to vector<8x1xf32>
    %82 = tpu.reciprocal %81 {approx = true} : vector<8x1xf32> -> vector<8x1xf32>
    %83 = vector.broadcast %82 : vector<8x1xf32> to vector<8x8xf32>
    %84 = arith.mulf %79, %83 : vector<8x8xf32>
    %85 = arith.index_cast %c1_i32 : i32 to index
    %c0_43 = arith.constant 0 : index
    %c0_44 = arith.constant 0 : index
    %86 = vector.load %arg1[%85, %c0_43, %c0_44] : memref<8x8x8xf32, #tpu.memory_space<vmem>>, vector<1x8x8xf32>
    %87 = vector.shape_cast %86 : vector<1x8x8xf32> to vector<8x8xf32>
    %88 = arith.mulf %84, %87 : vector<8x8xf32>
    %c0_45 = arith.constant 0 : index
    %c32_46 = arith.constant 32 : index
    %89 = vector.load %arg9[%c0_45, %c32_46] : memref<8x40xf32, #tpu.memory_space<vmem>>, vector<8x8xf32>
    tpu.vector_store %arg9[%c0_45, %c32_46], %88 {strides = array<i32>} : memref<8x40xf32, #tpu.memory_space<vmem>>, vector<8x8xf32>,
    %c0_47 = arith.constant 0 : index
    %c0_48 = arith.constant 0 : index
    %90 = vector.load %arg9[%c0_47, %c0_48] : memref<8x40xf32, #tpu.memory_space<vmem>>, vector<8x40xf32>
    %cst_49 = arith.constant dense<0.000000e+00> : vector<8x128xf32>
    %91 = tpu.matmul %90, %5, %cst_49 {dimension_numbers = #tpu.dot_dimension_numbers<[1], [0], [0], [1], [0, 0, 1, 1], [], []>} : vector<8x40xf32>, vector<40x128xf32>, vector<8x128xf32> -> vector<8x128xf32>
    %92 = vector.broadcast %6 : vector<1x128xf32> to vector<8x128xf32>
    %93 = arith.addf %91, %92 : vector<8x128xf32>
    %94 = arith.negf %93 : vector<8x128xf32>
    %95 = math.exp %94 : vector<8x128xf32>
    %cst_50 = arith.constant 1.000000e+00 : f32
    %96 = vector.broadcast %cst_50 : f32 to vector<8x128xf32>
    %97 = arith.addf %96, %95 : vector<8x128xf32>
    %98 = arith.divf %96, %97 : vector<8x128xf32>
    %99 = math.tanh %93 : vector<8x128xf32>
    %100 = vector.extract_strided_slice %98 {offsets = [0, 0], sizes = [8, 32], strides = [1, 1]} : vector<8x128xf32> to vector<8x32xf32>
    %101 = vector.extract_strided_slice %98 {offsets = [0, 32], sizes = [8, 32], strides = [1, 1]} : vector<8x128xf32> to vector<8x32xf32>
    %102 = vector.extract_strided_slice %99 {offsets = [0, 64], sizes = [8, 32], strides = [1, 1]} : vector<8x128xf32> to vector<8x32xf32>
    %103 = vector.extract_strided_slice %98 {offsets = [0, 96], sizes = [8, 32], strides = [1, 1]} : vector<8x128xf32> to vector<8x32xf32>
    %104 = arith.mulf %101, %65 : vector<8x32xf32>
    %105 = arith.mulf %100, %102 : vector<8x32xf32>
    %106 = arith.addf %104, %105 : vector<8x32xf32>
    %107 = math.tanh %106 : vector<8x32xf32>
    %108 = arith.mulf %103, %107 : vector<8x32xf32>
    %c0_51 = arith.constant 0 : index
    %c0_52 = arith.constant 0 : index
    %109 = vector.load %arg9[%c0_51, %c0_52] : memref<8x40xf32, #tpu.memory_space<vmem>>, vector<8x32xf32>
    tpu.vector_store %arg9[%c0_51, %c0_52], %108 {strides = array<i32>} : memref<8x40xf32, #tpu.memory_space<vmem>>, vector<8x32xf32>,
    %c0_53 = arith.constant 0 : index
    %c0_54 = arith.constant 0 : index
    %110 = vector.load %arg10[%c0_53, %c0_54] : memref<8x32xf32, #tpu.memory_space<vmem>>, vector<8x32xf32>
    tpu.vector_store %arg10[%c0_53, %c0_54], %106 {strides = array<i32>} : memref<8x32xf32, #tpu.memory_space<vmem>>, vector<8x32xf32>,
    %111 = arith.index_cast %c1_i32 : i32 to index
    %c0_55 = arith.constant 0 : index
    %c0_56 = arith.constant 0 : index
    %112 = vector.load %arg7[%111, %c0_55, %c0_56] : memref<8x8x8xf32, #tpu.memory_space<vmem>>, vector<1x8x8xf32>
    %113 = vector.shape_cast %112 : vector<1x8x8xf32> to vector<8x8xf32>
    %114 = vector.shape_cast %88 : vector<8x8xf32> to vector<1x8x8xf32>
    tpu.vector_store %arg7[%111, %c0_55, %c0_56], %114 {strides = array<i32>} : memref<8x8x8xf32, #tpu.memory_space<vmem>>, vector<1x8x8xf32>,
    %115 = arith.index_cast %c1_i32 : i32 to index
    %c0_57 = arith.constant 0 : index
    %c0_58 = arith.constant 0 : index
    %116 = vector.load %arg8[%115, %c0_57, %c0_58] : memref<8x8x32xf32, #tpu.memory_space<vmem>>, vector<1x8x32xf32>
    %117 = vector.shape_cast %116 : vector<1x8x32xf32> to vector<8x32xf32>
    %118 = vector.shape_cast %108 : vector<8x32xf32> to vector<1x8x32xf32>
    tpu.vector_store %arg8[%115, %c0_57, %c0_58], %118 {strides = array<i32>} : memref<8x8x32xf32, #tpu.memory_space<vmem>>, vector<1x8x32xf32>,
    %c2_i32 = arith.constant 2 : i32
    %c0_59 = arith.constant 0 : index
    %c0_60 = arith.constant 0 : index
    %119 = vector.load %arg9[%c0_59, %c0_60] : memref<8x40xf32, #tpu.memory_space<vmem>>, vector<8x32xf32>
    %c0_61 = arith.constant 0 : index
    %c0_62 = arith.constant 0 : index
    %120 = vector.load %arg10[%c0_61, %c0_62] : memref<8x32xf32, #tpu.memory_space<vmem>>, vector<8x32xf32>
    %121 = vector.broadcast %7 : vector<1x32xf32> to vector<8x32xf32>
    %122 = arith.mulf %119, %121 : vector<8x32xf32>
    %123 = vector.broadcast %8 : vector<1x32xf32> to vector<8x32xf32>
    %124 = arith.mulf %120, %123 : vector<8x32xf32>
    %125 = arith.addf %122, %124 : vector<8x32xf32>
    %cst_63 = arith.constant dense<0.000000e+00> : vector<8xf32>
    %126 = vector.multi_reduction <add>, %125, %cst_63 [1] : vector<8x32xf32> to vector<8xf32>
    %127 = vector.shape_cast %126 : vector<8xf32> to vector<8x1xf32>
    %128 = vector.broadcast %127 : vector<8x1xf32> to vector<8x8xf32>
    %129 = arith.addf %4, %128 : vector<8x8xf32>
    %cst_64 = arith.constant dense<0xFF800000> : vector<8xf32>
    %130 = vector.multi_reduction <maximumf>, %129, %cst_64 [1] : vector<8x8xf32> to vector<8xf32>
    %131 = vector.shape_cast %130 : vector<8xf32> to vector<8x1xf32>
    %132 = vector.broadcast %131 : vector<8x1xf32> to vector<8x8xf32>
    %133 = arith.subf %129, %132 : vector<8x8xf32>
    %134 = math.exp %133 : vector<8x8xf32>
    %cst_65 = arith.constant dense<0.000000e+00> : vector<8xf32>
    %135 = vector.multi_reduction <add>, %134, %cst_65 [1] : vector<8x8xf32> to vector<8xf32>
    %136 = vector.shape_cast %135 : vector<8xf32> to vector<8x1xf32>
    %137 = tpu.reciprocal %136 {approx = true} : vector<8x1xf32> -> vector<8x1xf32>
    %138 = vector.broadcast %137 : vector<8x1xf32> to vector<8x8xf32>
    %139 = arith.mulf %134, %138 : vector<8x8xf32>
    %140 = arith.index_cast %c2_i32 : i32 to index
    %c0_66 = arith.constant 0 : index
    %c0_67 = arith.constant 0 : index
    %141 = vector.load %arg1[%140, %c0_66, %c0_67] : memref<8x8x8xf32, #tpu.memory_space<vmem>>, vector<1x8x8xf32>
    %142 = vector.shape_cast %141 : vector<1x8x8xf32> to vector<8x8xf32>
    %143 = arith.mulf %139, %142 : vector<8x8xf32>
    %c0_68 = arith.constant 0 : index
    %c32_69 = arith.constant 32 : index
    %144 = vector.load %arg9[%c0_68, %c32_69] : memref<8x40xf32, #tpu.memory_space<vmem>>, vector<8x8xf32>
    tpu.vector_store %arg9[%c0_68, %c32_69], %143 {strides = array<i32>} : memref<8x40xf32, #tpu.memory_space<vmem>>, vector<8x8xf32>,
    %c0_70 = arith.constant 0 : index
    %c0_71 = arith.constant 0 : index
    %145 = vector.load %arg9[%c0_70, %c0_71] : memref<8x40xf32, #tpu.memory_space<vmem>>, vector<8x40xf32>
    %cst_72 = arith.constant dense<0.000000e+00> : vector<8x128xf32>
    %146 = tpu.matmul %145, %5, %cst_72 {dimension_numbers = #tpu.dot_dimension_numbers<[1], [0], [0], [1], [0, 0, 1, 1], [], []>} : vector<8x40xf32>, vector<40x128xf32>, vector<8x128xf32> -> vector<8x128xf32>
    %147 = vector.broadcast %6 : vector<1x128xf32> to vector<8x128xf32>
    %148 = arith.addf %146, %147 : vector<8x128xf32>
    %149 = arith.negf %148 : vector<8x128xf32>
    %150 = math.exp %149 : vector<8x128xf32>
    %cst_73 = arith.constant 1.000000e+00 : f32
    %151 = vector.broadcast %cst_73 : f32 to vector<8x128xf32>
    %152 = arith.addf %151, %150 : vector<8x128xf32>
    %153 = arith.divf %151, %152 : vector<8x128xf32>
    %154 = math.tanh %148 : vector<8x128xf32>
    %155 = vector.extract_strided_slice %153 {offsets = [0, 0], sizes = [8, 32], strides = [1, 1]} : vector<8x128xf32> to vector<8x32xf32>
    %156 = vector.extract_strided_slice %153 {offsets = [0, 32], sizes = [8, 32], strides = [1, 1]} : vector<8x128xf32> to vector<8x32xf32>
    %157 = vector.extract_strided_slice %154 {offsets = [0, 64], sizes = [8, 32], strides = [1, 1]} : vector<8x128xf32> to vector<8x32xf32>
    %158 = vector.extract_strided_slice %153 {offsets = [0, 96], sizes = [8, 32], strides = [1, 1]} : vector<8x128xf32> to vector<8x32xf32>
    %159 = arith.mulf %156, %120 : vector<8x32xf32>
    %160 = arith.mulf %155, %157 : vector<8x32xf32>
    %161 = arith.addf %159, %160 : vector<8x32xf32>
    %162 = math.tanh %161 : vector<8x32xf32>
    %163 = arith.mulf %158, %162 : vector<8x32xf32>
    %c0_74 = arith.constant 0 : index
    %c0_75 = arith.constant 0 : index
    %164 = vector.load %arg9[%c0_74, %c0_75] : memref<8x40xf32, #tpu.memory_space<vmem>>, vector<8x32xf32>
    tpu.vector_store %arg9[%c0_74, %c0_75], %163 {strides = array<i32>} : memref<8x40xf32, #tpu.memory_space<vmem>>, vector<8x32xf32>,
    %c0_76 = arith.constant 0 : index
    %c0_77 = arith.constant 0 : index
    %165 = vector.load %arg10[%c0_76, %c0_77] : memref<8x32xf32, #tpu.memory_space<vmem>>, vector<8x32xf32>
    tpu.vector_store %arg10[%c0_76, %c0_77], %161 {strides = array<i32>} : memref<8x32xf32, #tpu.memory_space<vmem>>, vector<8x32xf32>,
    %166 = arith.index_cast %c2_i32 : i32 to index
    %c0_78 = arith.constant 0 : index
    %c0_79 = arith.constant 0 : index
    %167 = vector.load %arg7[%166, %c0_78, %c0_79] : memref<8x8x8xf32, #tpu.memory_space<vmem>>, vector<1x8x8xf32>
    %168 = vector.shape_cast %167 : vector<1x8x8xf32> to vector<8x8xf32>
    %169 = vector.shape_cast %143 : vector<8x8xf32> to vector<1x8x8xf32>
    tpu.vector_store %arg7[%166, %c0_78, %c0_79], %169 {strides = array<i32>} : memref<8x8x8xf32, #tpu.memory_space<vmem>>, vector<1x8x8xf32>,
    %170 = arith.index_cast %c2_i32 : i32 to index
    %c0_80 = arith.constant 0 : index
    %c0_81 = arith.constant 0 : index
    %171 = vector.load %arg8[%170, %c0_80, %c0_81] : memref<8x8x32xf32, #tpu.memory_space<vmem>>, vector<1x8x32xf32>
    %172 = vector.shape_cast %171 : vector<1x8x32xf32> to vector<8x32xf32>
    %173 = vector.shape_cast %163 : vector<8x32xf32> to vector<1x8x32xf32>
    tpu.vector_store %arg8[%170, %c0_80, %c0_81], %173 {strides = array<i32>} : memref<8x8x32xf32, #tpu.memory_space<vmem>>, vector<1x8x32xf32>,
    %c3_i32 = arith.constant 3 : i32
    %c0_82 = arith.constant 0 : index
    %c0_83 = arith.constant 0 : index
    %174 = vector.load %arg9[%c0_82, %c0_83] : memref<8x40xf32, #tpu.memory_space<vmem>>, vector<8x32xf32>
    %c0_84 = arith.constant 0 : index
    %c0_85 = arith.constant 0 : index
    %175 = vector.load %arg10[%c0_84, %c0_85] : memref<8x32xf32, #tpu.memory_space<vmem>>, vector<8x32xf32>
    %176 = vector.broadcast %7 : vector<1x32xf32> to vector<8x32xf32>
    %177 = arith.mulf %174, %176 : vector<8x32xf32>
    %178 = vector.broadcast %8 : vector<1x32xf32> to vector<8x32xf32>
    %179 = arith.mulf %175, %178 : vector<8x32xf32>
    %180 = arith.addf %177, %179 : vector<8x32xf32>
    %cst_86 = arith.constant dense<0.000000e+00> : vector<8xf32>
    %181 = vector.multi_reduction <add>, %180, %cst_86 [1] : vector<8x32xf32> to vector<8xf32>
    %182 = vector.shape_cast %181 : vector<8xf32> to vector<8x1xf32>
    %183 = vector.broadcast %182 : vector<8x1xf32> to vector<8x8xf32>
    %184 = arith.addf %4, %183 : vector<8x8xf32>
    %cst_87 = arith.constant dense<0xFF800000> : vector<8xf32>
    %185 = vector.multi_reduction <maximumf>, %184, %cst_87 [1] : vector<8x8xf32> to vector<8xf32>
    %186 = vector.shape_cast %185 : vector<8xf32> to vector<8x1xf32>
    %187 = vector.broadcast %186 : vector<8x1xf32> to vector<8x8xf32>
    %188 = arith.subf %184, %187 : vector<8x8xf32>
    %189 = math.exp %188 : vector<8x8xf32>
    %cst_88 = arith.constant dense<0.000000e+00> : vector<8xf32>
    %190 = vector.multi_reduction <add>, %189, %cst_88 [1] : vector<8x8xf32> to vector<8xf32>
    %191 = vector.shape_cast %190 : vector<8xf32> to vector<8x1xf32>
    %192 = tpu.reciprocal %191 {approx = true} : vector<8x1xf32> -> vector<8x1xf32>
    %193 = vector.broadcast %192 : vector<8x1xf32> to vector<8x8xf32>
    %194 = arith.mulf %189, %193 : vector<8x8xf32>
    %195 = arith.index_cast %c3_i32 : i32 to index
    %c0_89 = arith.constant 0 : index
    %c0_90 = arith.constant 0 : index
    %196 = vector.load %arg1[%195, %c0_89, %c0_90] : memref<8x8x8xf32, #tpu.memory_space<vmem>>, vector<1x8x8xf32>
    %197 = vector.shape_cast %196 : vector<1x8x8xf32> to vector<8x8xf32>
    %198 = arith.mulf %194, %197 : vector<8x8xf32>
    %c0_91 = arith.constant 0 : index
    %c32_92 = arith.constant 32 : index
    %199 = vector.load %arg9[%c0_91, %c32_92] : memref<8x40xf32, #tpu.memory_space<vmem>>, vector<8x8xf32>
    tpu.vector_store %arg9[%c0_91, %c32_92], %198 {strides = array<i32>} : memref<8x40xf32, #tpu.memory_space<vmem>>, vector<8x8xf32>,
    %c0_93 = arith.constant 0 : index
    %c0_94 = arith.constant 0 : index
    %200 = vector.load %arg9[%c0_93, %c0_94] : memref<8x40xf32, #tpu.memory_space<vmem>>, vector<8x40xf32>
    %cst_95 = arith.constant dense<0.000000e+00> : vector<8x128xf32>
    %201 = tpu.matmul %200, %5, %cst_95 {dimension_numbers = #tpu.dot_dimension_numbers<[1], [0], [0], [1], [0, 0, 1, 1], [], []>} : vector<8x40xf32>, vector<40x128xf32>, vector<8x128xf32> -> vector<8x128xf32>
    %202 = vector.broadcast %6 : vector<1x128xf32> to vector<8x128xf32>
    %203 = arith.addf %201, %202 : vector<8x128xf32>
    %204 = arith.negf %203 : vector<8x128xf32>
    %205 = math.exp %204 : vector<8x128xf32>
    %cst_96 = arith.constant 1.000000e+00 : f32
    %206 = vector.broadcast %cst_96 : f32 to vector<8x128xf32>
    %207 = arith.addf %206, %205 : vector<8x128xf32>
    %208 = arith.divf %206, %207 : vector<8x128xf32>
    %209 = math.tanh %203 : vector<8x128xf32>
    %210 = vector.extract_strided_slice %208 {offsets = [0, 0], sizes = [8, 32], strides = [1, 1]} : vector<8x128xf32> to vector<8x32xf32>
    %211 = vector.extract_strided_slice %208 {offsets = [0, 32], sizes = [8, 32], strides = [1, 1]} : vector<8x128xf32> to vector<8x32xf32>
    %212 = vector.extract_strided_slice %209 {offsets = [0, 64], sizes = [8, 32], strides = [1, 1]} : vector<8x128xf32> to vector<8x32xf32>
    %213 = vector.extract_strided_slice %208 {offsets = [0, 96], sizes = [8, 32], strides = [1, 1]} : vector<8x128xf32> to vector<8x32xf32>
    %214 = arith.mulf %211, %175 : vector<8x32xf32>
    %215 = arith.mulf %210, %212 : vector<8x32xf32>
    %216 = arith.addf %214, %215 : vector<8x32xf32>
    %217 = math.tanh %216 : vector<8x32xf32>
    %218 = arith.mulf %213, %217 : vector<8x32xf32>
    %c0_97 = arith.constant 0 : index
    %c0_98 = arith.constant 0 : index
    %219 = vector.load %arg9[%c0_97, %c0_98] : memref<8x40xf32, #tpu.memory_space<vmem>>, vector<8x32xf32>
    tpu.vector_store %arg9[%c0_97, %c0_98], %218 {strides = array<i32>} : memref<8x40xf32, #tpu.memory_space<vmem>>, vector<8x32xf32>,
    %c0_99 = arith.constant 0 : index
    %c0_100 = arith.constant 0 : index
    %220 = vector.load %arg10[%c0_99, %c0_100] : memref<8x32xf32, #tpu.memory_space<vmem>>, vector<8x32xf32>
    tpu.vector_store %arg10[%c0_99, %c0_100], %216 {strides = array<i32>} : memref<8x32xf32, #tpu.memory_space<vmem>>, vector<8x32xf32>,
    %221 = arith.index_cast %c3_i32 : i32 to index
    %c0_101 = arith.constant 0 : index
    %c0_102 = arith.constant 0 : index
    %222 = vector.load %arg7[%221, %c0_101, %c0_102] : memref<8x8x8xf32, #tpu.memory_space<vmem>>, vector<1x8x8xf32>
    %223 = vector.shape_cast %222 : vector<1x8x8xf32> to vector<8x8xf32>
    %224 = vector.shape_cast %198 : vector<8x8xf32> to vector<1x8x8xf32>
    tpu.vector_store %arg7[%221, %c0_101, %c0_102], %224 {strides = array<i32>} : memref<8x8x8xf32, #tpu.memory_space<vmem>>, vector<1x8x8xf32>,
    %225 = arith.index_cast %c3_i32 : i32 to index
    %c0_103 = arith.constant 0 : index
    %c0_104 = arith.constant 0 : index
    %226 = vector.load %arg8[%225, %c0_103, %c0_104] : memref<8x8x32xf32, #tpu.memory_space<vmem>>, vector<1x8x32xf32>
    %227 = vector.shape_cast %226 : vector<1x8x32xf32> to vector<8x32xf32>
    %228 = vector.shape_cast %218 : vector<8x32xf32> to vector<1x8x32xf32>
    tpu.vector_store %arg8[%225, %c0_103, %c0_104], %228 {strides = array<i32>} : memref<8x8x32xf32, #tpu.memory_space<vmem>>, vector<1x8x32xf32>,
    %c4_i32 = arith.constant 4 : i32
    %c0_105 = arith.constant 0 : index
    %c0_106 = arith.constant 0 : index
    %229 = vector.load %arg9[%c0_105, %c0_106] : memref<8x40xf32, #tpu.memory_space<vmem>>, vector<8x32xf32>
    %c0_107 = arith.constant 0 : index
    %c0_108 = arith.constant 0 : index
    %230 = vector.load %arg10[%c0_107, %c0_108] : memref<8x32xf32, #tpu.memory_space<vmem>>, vector<8x32xf32>
    %231 = vector.broadcast %7 : vector<1x32xf32> to vector<8x32xf32>
    %232 = arith.mulf %229, %231 : vector<8x32xf32>
    %233 = vector.broadcast %8 : vector<1x32xf32> to vector<8x32xf32>
    %234 = arith.mulf %230, %233 : vector<8x32xf32>
    %235 = arith.addf %232, %234 : vector<8x32xf32>
    %cst_109 = arith.constant dense<0.000000e+00> : vector<8xf32>
    %236 = vector.multi_reduction <add>, %235, %cst_109 [1] : vector<8x32xf32> to vector<8xf32>
    %237 = vector.shape_cast %236 : vector<8xf32> to vector<8x1xf32>
    %238 = vector.broadcast %237 : vector<8x1xf32> to vector<8x8xf32>
    %239 = arith.addf %4, %238 : vector<8x8xf32>
    %cst_110 = arith.constant dense<0xFF800000> : vector<8xf32>
    %240 = vector.multi_reduction <maximumf>, %239, %cst_110 [1] : vector<8x8xf32> to vector<8xf32>
    %241 = vector.shape_cast %240 : vector<8xf32> to vector<8x1xf32>
    %242 = vector.broadcast %241 : vector<8x1xf32> to vector<8x8xf32>
    %243 = arith.subf %239, %242 : vector<8x8xf32>
    %244 = math.exp %243 : vector<8x8xf32>
    %cst_111 = arith.constant dense<0.000000e+00> : vector<8xf32>
    %245 = vector.multi_reduction <add>, %244, %cst_111 [1] : vector<8x8xf32> to vector<8xf32>
    %246 = vector.shape_cast %245 : vector<8xf32> to vector<8x1xf32>
    %247 = tpu.reciprocal %246 {approx = true} : vector<8x1xf32> -> vector<8x1xf32>
    %248 = vector.broadcast %247 : vector<8x1xf32> to vector<8x8xf32>
    %249 = arith.mulf %244, %248 : vector<8x8xf32>
    %250 = arith.index_cast %c4_i32 : i32 to index
    %c0_112 = arith.constant 0 : index
    %c0_113 = arith.constant 0 : index
    %251 = vector.load %arg1[%250, %c0_112, %c0_113] : memref<8x8x8xf32, #tpu.memory_space<vmem>>, vector<1x8x8xf32>
    %252 = vector.shape_cast %251 : vector<1x8x8xf32> to vector<8x8xf32>
    %253 = arith.mulf %249, %252 : vector<8x8xf32>
    %c0_114 = arith.constant 0 : index
    %c32_115 = arith.constant 32 : index
    %254 = vector.load %arg9[%c0_114, %c32_115] : memref<8x40xf32, #tpu.memory_space<vmem>>, vector<8x8xf32>
    tpu.vector_store %arg9[%c0_114, %c32_115], %253 {strides = array<i32>} : memref<8x40xf32, #tpu.memory_space<vmem>>, vector<8x8xf32>,
    %c0_116 = arith.constant 0 : index
    %c0_117 = arith.constant 0 : index
    %255 = vector.load %arg9[%c0_116, %c0_117] : memref<8x40xf32, #tpu.memory_space<vmem>>, vector<8x40xf32>
    %cst_118 = arith.constant dense<0.000000e+00> : vector<8x128xf32>
    %256 = tpu.matmul %255, %5, %cst_118 {dimension_numbers = #tpu.dot_dimension_numbers<[1], [0], [0], [1], [0, 0, 1, 1], [], []>} : vector<8x40xf32>, vector<40x128xf32>, vector<8x128xf32> -> vector<8x128xf32>
    %257 = vector.broadcast %6 : vector<1x128xf32> to vector<8x128xf32>
    %258 = arith.addf %256, %257 : vector<8x128xf32>
    %259 = arith.negf %258 : vector<8x128xf32>
    %260 = math.exp %259 : vector<8x128xf32>
    %cst_119 = arith.constant 1.000000e+00 : f32
    %261 = vector.broadcast %cst_119 : f32 to vector<8x128xf32>
    %262 = arith.addf %261, %260 : vector<8x128xf32>
    %263 = arith.divf %261, %262 : vector<8x128xf32>
    %264 = math.tanh %258 : vector<8x128xf32>
    %265 = vector.extract_strided_slice %263 {offsets = [0, 0], sizes = [8, 32], strides = [1, 1]} : vector<8x128xf32> to vector<8x32xf32>
    %266 = vector.extract_strided_slice %263 {offsets = [0, 32], sizes = [8, 32], strides = [1, 1]} : vector<8x128xf32> to vector<8x32xf32>
    %267 = vector.extract_strided_slice %264 {offsets = [0, 64], sizes = [8, 32], strides = [1, 1]} : vector<8x128xf32> to vector<8x32xf32>
    %268 = vector.extract_strided_slice %263 {offsets = [0, 96], sizes = [8, 32], strides = [1, 1]} : vector<8x128xf32> to vector<8x32xf32>
    %269 = arith.mulf %266, %230 : vector<8x32xf32>
    %270 = arith.mulf %265, %267 : vector<8x32xf32>
    %271 = arith.addf %269, %270 : vector<8x32xf32>
    %272 = math.tanh %271 : vector<8x32xf32>
    %273 = arith.mulf %268, %272 : vector<8x32xf32>
    %c0_120 = arith.constant 0 : index
    %c0_121 = arith.constant 0 : index
    %274 = vector.load %arg9[%c0_120, %c0_121] : memref<8x40xf32, #tpu.memory_space<vmem>>, vector<8x32xf32>
    tpu.vector_store %arg9[%c0_120, %c0_121], %273 {strides = array<i32>} : memref<8x40xf32, #tpu.memory_space<vmem>>, vector<8x32xf32>,
    %c0_122 = arith.constant 0 : index
    %c0_123 = arith.constant 0 : index
    %275 = vector.load %arg10[%c0_122, %c0_123] : memref<8x32xf32, #tpu.memory_space<vmem>>, vector<8x32xf32>
    tpu.vector_store %arg10[%c0_122, %c0_123], %271 {strides = array<i32>} : memref<8x32xf32, #tpu.memory_space<vmem>>, vector<8x32xf32>,
    %276 = arith.index_cast %c4_i32 : i32 to index
    %c0_124 = arith.constant 0 : index
    %c0_125 = arith.constant 0 : index
    %277 = vector.load %arg7[%276, %c0_124, %c0_125] : memref<8x8x8xf32, #tpu.memory_space<vmem>>, vector<1x8x8xf32>
    %278 = vector.shape_cast %277 : vector<1x8x8xf32> to vector<8x8xf32>
    %279 = vector.shape_cast %253 : vector<8x8xf32> to vector<1x8x8xf32>
    tpu.vector_store %arg7[%276, %c0_124, %c0_125], %279 {strides = array<i32>} : memref<8x8x8xf32, #tpu.memory_space<vmem>>, vector<1x8x8xf32>,
    %280 = arith.index_cast %c4_i32 : i32 to index
    %c0_126 = arith.constant 0 : index
    %c0_127 = arith.constant 0 : index
    %281 = vector.load %arg8[%280, %c0_126, %c0_127] : memref<8x8x32xf32, #tpu.memory_space<vmem>>, vector<1x8x32xf32>
    %282 = vector.shape_cast %281 : vector<1x8x32xf32> to vector<8x32xf32>
    %283 = vector.shape_cast %273 : vector<8x32xf32> to vector<1x8x32xf32>
    tpu.vector_store %arg8[%280, %c0_126, %c0_127], %283 {strides = array<i32>} : memref<8x8x32xf32, #tpu.memory_space<vmem>>, vector<1x8x32xf32>,
    %c5_i32 = arith.constant 5 : i32
    %c0_128 = arith.constant 0 : index
    %c0_129 = arith.constant 0 : index
    %284 = vector.load %arg9[%c0_128, %c0_129] : memref<8x40xf32, #tpu.memory_space<vmem>>, vector<8x32xf32>
    %c0_130 = arith.constant 0 : index
    %c0_131 = arith.constant 0 : index
    %285 = vector.load %arg10[%c0_130, %c0_131] : memref<8x32xf32, #tpu.memory_space<vmem>>, vector<8x32xf32>
    %286 = vector.broadcast %7 : vector<1x32xf32> to vector<8x32xf32>
    %287 = arith.mulf %284, %286 : vector<8x32xf32>
    %288 = vector.broadcast %8 : vector<1x32xf32> to vector<8x32xf32>
    %289 = arith.mulf %285, %288 : vector<8x32xf32>
    %290 = arith.addf %287, %289 : vector<8x32xf32>
    %cst_132 = arith.constant dense<0.000000e+00> : vector<8xf32>
    %291 = vector.multi_reduction <add>, %290, %cst_132 [1] : vector<8x32xf32> to vector<8xf32>
    %292 = vector.shape_cast %291 : vector<8xf32> to vector<8x1xf32>
    %293 = vector.broadcast %292 : vector<8x1xf32> to vector<8x8xf32>
    %294 = arith.addf %4, %293 : vector<8x8xf32>
    %cst_133 = arith.constant dense<0xFF800000> : vector<8xf32>
    %295 = vector.multi_reduction <maximumf>, %294, %cst_133 [1] : vector<8x8xf32> to vector<8xf32>
    %296 = vector.shape_cast %295 : vector<8xf32> to vector<8x1xf32>
    %297 = vector.broadcast %296 : vector<8x1xf32> to vector<8x8xf32>
    %298 = arith.subf %294, %297 : vector<8x8xf32>
    %299 = math.exp %298 : vector<8x8xf32>
    %cst_134 = arith.constant dense<0.000000e+00> : vector<8xf32>
    %300 = vector.multi_reduction <add>, %299, %cst_134 [1] : vector<8x8xf32> to vector<8xf32>
    %301 = vector.shape_cast %300 : vector<8xf32> to vector<8x1xf32>
    %302 = tpu.reciprocal %301 {approx = true} : vector<8x1xf32> -> vector<8x1xf32>
    %303 = vector.broadcast %302 : vector<8x1xf32> to vector<8x8xf32>
    %304 = arith.mulf %299, %303 : vector<8x8xf32>
    %305 = arith.index_cast %c5_i32 : i32 to index
    %c0_135 = arith.constant 0 : index
    %c0_136 = arith.constant 0 : index
    %306 = vector.load %arg1[%305, %c0_135, %c0_136] : memref<8x8x8xf32, #tpu.memory_space<vmem>>, vector<1x8x8xf32>
    %307 = vector.shape_cast %306 : vector<1x8x8xf32> to vector<8x8xf32>
    %308 = arith.mulf %304, %307 : vector<8x8xf32>
    %c0_137 = arith.constant 0 : index
    %c32_138 = arith.constant 32 : index
    %309 = vector.load %arg9[%c0_137, %c32_138] : memref<8x40xf32, #tpu.memory_space<vmem>>, vector<8x8xf32>
    tpu.vector_store %arg9[%c0_137, %c32_138], %308 {strides = array<i32>} : memref<8x40xf32, #tpu.memory_space<vmem>>, vector<8x8xf32>,
    %c0_139 = arith.constant 0 : index
    %c0_140 = arith.constant 0 : index
    %310 = vector.load %arg9[%c0_139, %c0_140] : memref<8x40xf32, #tpu.memory_space<vmem>>, vector<8x40xf32>
    %cst_141 = arith.constant dense<0.000000e+00> : vector<8x128xf32>
    %311 = tpu.matmul %310, %5, %cst_141 {dimension_numbers = #tpu.dot_dimension_numbers<[1], [0], [0], [1], [0, 0, 1, 1], [], []>} : vector<8x40xf32>, vector<40x128xf32>, vector<8x128xf32> -> vector<8x128xf32>
    %312 = vector.broadcast %6 : vector<1x128xf32> to vector<8x128xf32>
    %313 = arith.addf %311, %312 : vector<8x128xf32>
    %314 = arith.negf %313 : vector<8x128xf32>
    %315 = math.exp %314 : vector<8x128xf32>
    %cst_142 = arith.constant 1.000000e+00 : f32
    %316 = vector.broadcast %cst_142 : f32 to vector<8x128xf32>
    %317 = arith.addf %316, %315 : vector<8x128xf32>
    %318 = arith.divf %316, %317 : vector<8x128xf32>
    %319 = math.tanh %313 : vector<8x128xf32>
    %320 = vector.extract_strided_slice %318 {offsets = [0, 0], sizes = [8, 32], strides = [1, 1]} : vector<8x128xf32> to vector<8x32xf32>
    %321 = vector.extract_strided_slice %318 {offsets = [0, 32], sizes = [8, 32], strides = [1, 1]} : vector<8x128xf32> to vector<8x32xf32>
    %322 = vector.extract_strided_slice %319 {offsets = [0, 64], sizes = [8, 32], strides = [1, 1]} : vector<8x128xf32> to vector<8x32xf32>
    %323 = vector.extract_strided_slice %318 {offsets = [0, 96], sizes = [8, 32], strides = [1, 1]} : vector<8x128xf32> to vector<8x32xf32>
    %324 = arith.mulf %321, %285 : vector<8x32xf32>
    %325 = arith.mulf %320, %322 : vector<8x32xf32>
    %326 = arith.addf %324, %325 : vector<8x32xf32>
    %327 = math.tanh %326 : vector<8x32xf32>
    %328 = arith.mulf %323, %327 : vector<8x32xf32>
    %c0_143 = arith.constant 0 : index
    %c0_144 = arith.constant 0 : index
    %329 = vector.load %arg9[%c0_143, %c0_144] : memref<8x40xf32, #tpu.memory_space<vmem>>, vector<8x32xf32>
    tpu.vector_store %arg9[%c0_143, %c0_144], %328 {strides = array<i32>} : memref<8x40xf32, #tpu.memory_space<vmem>>, vector<8x32xf32>,
    %c0_145 = arith.constant 0 : index
    %c0_146 = arith.constant 0 : index
    %330 = vector.load %arg10[%c0_145, %c0_146] : memref<8x32xf32, #tpu.memory_space<vmem>>, vector<8x32xf32>
    tpu.vector_store %arg10[%c0_145, %c0_146], %326 {strides = array<i32>} : memref<8x32xf32, #tpu.memory_space<vmem>>, vector<8x32xf32>,
    %331 = arith.index_cast %c5_i32 : i32 to index
    %c0_147 = arith.constant 0 : index
    %c0_148 = arith.constant 0 : index
    %332 = vector.load %arg7[%331, %c0_147, %c0_148] : memref<8x8x8xf32, #tpu.memory_space<vmem>>, vector<1x8x8xf32>
    %333 = vector.shape_cast %332 : vector<1x8x8xf32> to vector<8x8xf32>
    %334 = vector.shape_cast %308 : vector<8x8xf32> to vector<1x8x8xf32>
    tpu.vector_store %arg7[%331, %c0_147, %c0_148], %334 {strides = array<i32>} : memref<8x8x8xf32, #tpu.memory_space<vmem>>, vector<1x8x8xf32>,
    %335 = arith.index_cast %c5_i32 : i32 to index
    %c0_149 = arith.constant 0 : index
    %c0_150 = arith.constant 0 : index
    %336 = vector.load %arg8[%335, %c0_149, %c0_150] : memref<8x8x32xf32, #tpu.memory_space<vmem>>, vector<1x8x32xf32>
    %337 = vector.shape_cast %336 : vector<1x8x32xf32> to vector<8x32xf32>
    %338 = vector.shape_cast %328 : vector<8x32xf32> to vector<1x8x32xf32>
    tpu.vector_store %arg8[%335, %c0_149, %c0_150], %338 {strides = array<i32>} : memref<8x8x32xf32, #tpu.memory_space<vmem>>, vector<1x8x32xf32>,
    %c6_i32 = arith.constant 6 : i32
    %c0_151 = arith.constant 0 : index
    %c0_152 = arith.constant 0 : index
    %339 = vector.load %arg9[%c0_151, %c0_152] : memref<8x40xf32, #tpu.memory_space<vmem>>, vector<8x32xf32>
    %c0_153 = arith.constant 0 : index
    %c0_154 = arith.constant 0 : index
    %340 = vector.load %arg10[%c0_153, %c0_154] : memref<8x32xf32, #tpu.memory_space<vmem>>, vector<8x32xf32>
    %341 = vector.broadcast %7 : vector<1x32xf32> to vector<8x32xf32>
    %342 = arith.mulf %339, %341 : vector<8x32xf32>
    %343 = vector.broadcast %8 : vector<1x32xf32> to vector<8x32xf32>
    %344 = arith.mulf %340, %343 : vector<8x32xf32>
    %345 = arith.addf %342, %344 : vector<8x32xf32>
    %cst_155 = arith.constant dense<0.000000e+00> : vector<8xf32>
    %346 = vector.multi_reduction <add>, %345, %cst_155 [1] : vector<8x32xf32> to vector<8xf32>
    %347 = vector.shape_cast %346 : vector<8xf32> to vector<8x1xf32>
    %348 = vector.broadcast %347 : vector<8x1xf32> to vector<8x8xf32>
    %349 = arith.addf %4, %348 : vector<8x8xf32>
    %cst_156 = arith.constant dense<0xFF800000> : vector<8xf32>
    %350 = vector.multi_reduction <maximumf>, %349, %cst_156 [1] : vector<8x8xf32> to vector<8xf32>
    %351 = vector.shape_cast %350 : vector<8xf32> to vector<8x1xf32>
    %352 = vector.broadcast %351 : vector<8x1xf32> to vector<8x8xf32>
    %353 = arith.subf %349, %352 : vector<8x8xf32>
    %354 = math.exp %353 : vector<8x8xf32>
    %cst_157 = arith.constant dense<0.000000e+00> : vector<8xf32>
    %355 = vector.multi_reduction <add>, %354, %cst_157 [1] : vector<8x8xf32> to vector<8xf32>
    %356 = vector.shape_cast %355 : vector<8xf32> to vector<8x1xf32>
    %357 = tpu.reciprocal %356 {approx = true} : vector<8x1xf32> -> vector<8x1xf32>
    %358 = vector.broadcast %357 : vector<8x1xf32> to vector<8x8xf32>
    %359 = arith.mulf %354, %358 : vector<8x8xf32>
    %360 = arith.index_cast %c6_i32 : i32 to index
    %c0_158 = arith.constant 0 : index
    %c0_159 = arith.constant 0 : index
    %361 = vector.load %arg1[%360, %c0_158, %c0_159] : memref<8x8x8xf32, #tpu.memory_space<vmem>>, vector<1x8x8xf32>
    %362 = vector.shape_cast %361 : vector<1x8x8xf32> to vector<8x8xf32>
    %363 = arith.mulf %359, %362 : vector<8x8xf32>
    %c0_160 = arith.constant 0 : index
    %c32_161 = arith.constant 32 : index
    %364 = vector.load %arg9[%c0_160, %c32_161] : memref<8x40xf32, #tpu.memory_space<vmem>>, vector<8x8xf32>
    tpu.vector_store %arg9[%c0_160, %c32_161], %363 {strides = array<i32>} : memref<8x40xf32, #tpu.memory_space<vmem>>, vector<8x8xf32>,
    %c0_162 = arith.constant 0 : index
    %c0_163 = arith.constant 0 : index
    %365 = vector.load %arg9[%c0_162, %c0_163] : memref<8x40xf32, #tpu.memory_space<vmem>>, vector<8x40xf32>
    %cst_164 = arith.constant dense<0.000000e+00> : vector<8x128xf32>
    %366 = tpu.matmul %365, %5, %cst_164 {dimension_numbers = #tpu.dot_dimension_numbers<[1], [0], [0], [1], [0, 0, 1, 1], [], []>} : vector<8x40xf32>, vector<40x128xf32>, vector<8x128xf32> -> vector<8x128xf32>
    %367 = vector.broadcast %6 : vector<1x128xf32> to vector<8x128xf32>
    %368 = arith.addf %366, %367 : vector<8x128xf32>
    %369 = arith.negf %368 : vector<8x128xf32>
    %370 = math.exp %369 : vector<8x128xf32>
    %cst_165 = arith.constant 1.000000e+00 : f32
    %371 = vector.broadcast %cst_165 : f32 to vector<8x128xf32>
    %372 = arith.addf %371, %370 : vector<8x128xf32>
    %373 = arith.divf %371, %372 : vector<8x128xf32>
    %374 = math.tanh %368 : vector<8x128xf32>
    %375 = vector.extract_strided_slice %373 {offsets = [0, 0], sizes = [8, 32], strides = [1, 1]} : vector<8x128xf32> to vector<8x32xf32>
    %376 = vector.extract_strided_slice %373 {offsets = [0, 32], sizes = [8, 32], strides = [1, 1]} : vector<8x128xf32> to vector<8x32xf32>
    %377 = vector.extract_strided_slice %374 {offsets = [0, 64], sizes = [8, 32], strides = [1, 1]} : vector<8x128xf32> to vector<8x32xf32>
    %378 = vector.extract_strided_slice %373 {offsets = [0, 96], sizes = [8, 32], strides = [1, 1]} : vector<8x128xf32> to vector<8x32xf32>
    %379 = arith.mulf %376, %340 : vector<8x32xf32>
    %380 = arith.mulf %375, %377 : vector<8x32xf32>
    %381 = arith.addf %379, %380 : vector<8x32xf32>
    %382 = math.tanh %381 : vector<8x32xf32>
    %383 = arith.mulf %378, %382 : vector<8x32xf32>
    %c0_166 = arith.constant 0 : index
    %c0_167 = arith.constant 0 : index
    %384 = vector.load %arg9[%c0_166, %c0_167] : memref<8x40xf32, #tpu.memory_space<vmem>>, vector<8x32xf32>
    tpu.vector_store %arg9[%c0_166, %c0_167], %383 {strides = array<i32>} : memref<8x40xf32, #tpu.memory_space<vmem>>, vector<8x32xf32>,
    %c0_168 = arith.constant 0 : index
    %c0_169 = arith.constant 0 : index
    %385 = vector.load %arg10[%c0_168, %c0_169] : memref<8x32xf32, #tpu.memory_space<vmem>>, vector<8x32xf32>
    tpu.vector_store %arg10[%c0_168, %c0_169], %381 {strides = array<i32>} : memref<8x32xf32, #tpu.memory_space<vmem>>, vector<8x32xf32>,
    %386 = arith.index_cast %c6_i32 : i32 to index
    %c0_170 = arith.constant 0 : index
    %c0_171 = arith.constant 0 : index
    %387 = vector.load %arg7[%386, %c0_170, %c0_171] : memref<8x8x8xf32, #tpu.memory_space<vmem>>, vector<1x8x8xf32>
    %388 = vector.shape_cast %387 : vector<1x8x8xf32> to vector<8x8xf32>
    %389 = vector.shape_cast %363 : vector<8x8xf32> to vector<1x8x8xf32>
    tpu.vector_store %arg7[%386, %c0_170, %c0_171], %389 {strides = array<i32>} : memref<8x8x8xf32, #tpu.memory_space<vmem>>, vector<1x8x8xf32>,
    %390 = arith.index_cast %c6_i32 : i32 to index
    %c0_172 = arith.constant 0 : index
    %c0_173 = arith.constant 0 : index
    %391 = vector.load %arg8[%390, %c0_172, %c0_173] : memref<8x8x32xf32, #tpu.memory_space<vmem>>, vector<1x8x32xf32>
    %392 = vector.shape_cast %391 : vector<1x8x32xf32> to vector<8x32xf32>
    %393 = vector.shape_cast %383 : vector<8x32xf32> to vector<1x8x32xf32>
    tpu.vector_store %arg8[%390, %c0_172, %c0_173], %393 {strides = array<i32>} : memref<8x8x32xf32, #tpu.memory_space<vmem>>, vector<1x8x32xf32>,
    %c7_i32 = arith.constant 7 : i32
    %c0_174 = arith.constant 0 : index
    %c0_175 = arith.constant 0 : index
    %394 = vector.load %arg9[%c0_174, %c0_175] : memref<8x40xf32, #tpu.memory_space<vmem>>, vector<8x32xf32>
    %c0_176 = arith.constant 0 : index
    %c0_177 = arith.constant 0 : index
    %395 = vector.load %arg10[%c0_176, %c0_177] : memref<8x32xf32, #tpu.memory_space<vmem>>, vector<8x32xf32>
    %396 = vector.broadcast %7 : vector<1x32xf32> to vector<8x32xf32>
    %397 = arith.mulf %394, %396 : vector<8x32xf32>
    %398 = vector.broadcast %8 : vector<1x32xf32> to vector<8x32xf32>
    %399 = arith.mulf %395, %398 : vector<8x32xf32>
    %400 = arith.addf %397, %399 : vector<8x32xf32>
    %cst_178 = arith.constant dense<0.000000e+00> : vector<8xf32>
    %401 = vector.multi_reduction <add>, %400, %cst_178 [1] : vector<8x32xf32> to vector<8xf32>
    %402 = vector.shape_cast %401 : vector<8xf32> to vector<8x1xf32>
    %403 = vector.broadcast %402 : vector<8x1xf32> to vector<8x8xf32>
    %404 = arith.addf %4, %403 : vector<8x8xf32>
    %cst_179 = arith.constant dense<0xFF800000> : vector<8xf32>
    %405 = vector.multi_reduction <maximumf>, %404, %cst_179 [1] : vector<8x8xf32> to vector<8xf32>
    %406 = vector.shape_cast %405 : vector<8xf32> to vector<8x1xf32>
    %407 = vector.broadcast %406 : vector<8x1xf32> to vector<8x8xf32>
    %408 = arith.subf %404, %407 : vector<8x8xf32>
    %409 = math.exp %408 : vector<8x8xf32>
    %cst_180 = arith.constant dense<0.000000e+00> : vector<8xf32>
    %410 = vector.multi_reduction <add>, %409, %cst_180 [1] : vector<8x8xf32> to vector<8xf32>
    %411 = vector.shape_cast %410 : vector<8xf32> to vector<8x1xf32>
    %412 = tpu.reciprocal %411 {approx = true} : vector<8x1xf32> -> vector<8x1xf32>
    %413 = vector.broadcast %412 : vector<8x1xf32> to vector<8x8xf32>
    %414 = arith.mulf %409, %413 : vector<8x8xf32>
    %415 = arith.index_cast %c7_i32 : i32 to index
    %c0_181 = arith.constant 0 : index
    %c0_182 = arith.constant 0 : index
    %416 = vector.load %arg1[%415, %c0_181, %c0_182] : memref<8x8x8xf32, #tpu.memory_space<vmem>>, vector<1x8x8xf32>
    %417 = vector.shape_cast %416 : vector<1x8x8xf32> to vector<8x8xf32>
    %418 = arith.mulf %414, %417 : vector<8x8xf32>
    %c0_183 = arith.constant 0 : index
    %c32_184 = arith.constant 32 : index
    %419 = vector.load %arg9[%c0_183, %c32_184] : memref<8x40xf32, #tpu.memory_space<vmem>>, vector<8x8xf32>
    tpu.vector_store %arg9[%c0_183, %c32_184], %418 {strides = array<i32>} : memref<8x40xf32, #tpu.memory_space<vmem>>, vector<8x8xf32>,
    %c0_185 = arith.constant 0 : index
    %c0_186 = arith.constant 0 : index
    %420 = vector.load %arg9[%c0_185, %c0_186] : memref<8x40xf32, #tpu.memory_space<vmem>>, vector<8x40xf32>
    %cst_187 = arith.constant dense<0.000000e+00> : vector<8x128xf32>
    %421 = tpu.matmul %420, %5, %cst_187 {dimension_numbers = #tpu.dot_dimension_numbers<[1], [0], [0], [1], [0, 0, 1, 1], [], []>} : vector<8x40xf32>, vector<40x128xf32>, vector<8x128xf32> -> vector<8x128xf32>
    %422 = vector.broadcast %6 : vector<1x128xf32> to vector<8x128xf32>
    %423 = arith.addf %421, %422 : vector<8x128xf32>
    %424 = arith.negf %423 : vector<8x128xf32>
    %425 = math.exp %424 : vector<8x128xf32>
    %cst_188 = arith.constant 1.000000e+00 : f32
    %426 = vector.broadcast %cst_188 : f32 to vector<8x128xf32>
    %427 = arith.addf %426, %425 : vector<8x128xf32>
    %428 = arith.divf %426, %427 : vector<8x128xf32>
    %429 = math.tanh %423 : vector<8x128xf32>
    %430 = vector.extract_strided_slice %428 {offsets = [0, 0], sizes = [8, 32], strides = [1, 1]} : vector<8x128xf32> to vector<8x32xf32>
    %431 = vector.extract_strided_slice %428 {offsets = [0, 32], sizes = [8, 32], strides = [1, 1]} : vector<8x128xf32> to vector<8x32xf32>
    %432 = vector.extract_strided_slice %429 {offsets = [0, 64], sizes = [8, 32], strides = [1, 1]} : vector<8x128xf32> to vector<8x32xf32>
    %433 = vector.extract_strided_slice %428 {offsets = [0, 96], sizes = [8, 32], strides = [1, 1]} : vector<8x128xf32> to vector<8x32xf32>
    %434 = arith.mulf %431, %395 : vector<8x32xf32>
    %435 = arith.mulf %430, %432 : vector<8x32xf32>
    %436 = arith.addf %434, %435 : vector<8x32xf32>
    %437 = math.tanh %436 : vector<8x32xf32>
    %438 = arith.mulf %433, %437 : vector<8x32xf32>
    %c0_189 = arith.constant 0 : index
    %c0_190 = arith.constant 0 : index
    %439 = vector.load %arg9[%c0_189, %c0_190] : memref<8x40xf32, #tpu.memory_space<vmem>>, vector<8x32xf32>
    tpu.vector_store %arg9[%c0_189, %c0_190], %438 {strides = array<i32>} : memref<8x40xf32, #tpu.memory_space<vmem>>, vector<8x32xf32>,
    %c0_191 = arith.constant 0 : index
    %c0_192 = arith.constant 0 : index
    %440 = vector.load %arg10[%c0_191, %c0_192] : memref<8x32xf32, #tpu.memory_space<vmem>>, vector<8x32xf32>
    tpu.vector_store %arg10[%c0_191, %c0_192], %436 {strides = array<i32>} : memref<8x32xf32, #tpu.memory_space<vmem>>, vector<8x32xf32>,
    %441 = arith.index_cast %c7_i32 : i32 to index
    %c0_193 = arith.constant 0 : index
    %c0_194 = arith.constant 0 : index
    %442 = vector.load %arg7[%441, %c0_193, %c0_194] : memref<8x8x8xf32, #tpu.memory_space<vmem>>, vector<1x8x8xf32>
    %443 = vector.shape_cast %442 : vector<1x8x8xf32> to vector<8x8xf32>
    %444 = vector.shape_cast %418 : vector<8x8xf32> to vector<1x8x8xf32>
    tpu.vector_store %arg7[%441, %c0_193, %c0_194], %444 {strides = array<i32>} : memref<8x8x8xf32, #tpu.memory_space<vmem>>, vector<1x8x8xf32>,
    %445 = arith.index_cast %c7_i32 : i32 to index
    %c0_195 = arith.constant 0 : index
    %c0_196 = arith.constant 0 : index
    %446 = vector.load %arg8[%445, %c0_195, %c0_196] : memref<8x8x32xf32, #tpu.memory_space<vmem>>, vector<1x8x32xf32>
    %447 = vector.shape_cast %446 : vector<1x8x32xf32> to vector<8x32xf32>
    %448 = vector.shape_cast %438 : vector<8x32xf32> to vector<1x8x32xf32>
    tpu.vector_store %arg8[%445, %c0_195, %c0_196], %448 {strides = array<i32>} : memref<8x8x32xf32, #tpu.memory_space<vmem>>, vector<1x8x32xf32>,
    %c8_i32 = arith.constant 8 : i32
    return
  }
  func.func @transform_0(%arg0: i32) -> (i32, i32, i32) {
    %c0_i32 = arith.constant 0 : i32
    %c0_i32_0 = arith.constant 0 : i32
    %c0_i32_1 = arith.constant 0 : i32
    return %c0_i32, %arg0, %c0_i32_0 : i32, i32, i32
  }
  func.func @transform_1(%arg0: i32) -> (i32, i32) {
    %c0_i32 = arith.constant 0 : i32
    %c0_i32_0 = arith.constant 0 : i32
    return %arg0, %c0_i32 : i32, i32
  }
  func.func @transform_2(%arg0: i32) -> (i32, i32) {
    %c0_i32 = arith.constant 0 : i32
    %c0_i32_0 = arith.constant 0 : i32
    %c0_i32_1 = arith.constant 0 : i32
    return %c0_i32, %c0_i32_0 : i32, i32
  }
  func.func @transform_3(%arg0: i32) -> (i32, i32) {
    %c0_i32 = arith.constant 0 : i32
    %c0_i32_0 = arith.constant 0 : i32
    %c0_i32_1 = arith.constant 0 : i32
    return %c0_i32, %c0_i32_0 : i32, i32
  }
  func.func @transform_4(%arg0: i32) -> (i32, i32) {
    %c0_i32 = arith.constant 0 : i32
    %c0_i32_0 = arith.constant 0 : i32
    %c0_i32_1 = arith.constant 0 : i32
    return %c0_i32, %c0_i32_0 : i32, i32
  }
  func.func @transform_5(%arg0: i32) -> (i32, i32) {
    %c0_i32 = arith.constant 0 : i32
    %c0_i32_0 = arith.constant 0 : i32
    %c0_i32_1 = arith.constant 0 : i32
    return %c0_i32, %c0_i32_0 : i32, i32
  }
  func.func @transform_6(%arg0: i32) -> (i32, i32, i32) {
    %c0_i32 = arith.constant 0 : i32
    %c0_i32_0 = arith.constant 0 : i32
    %c0_i32_1 = arith.constant 0 : i32
    return %c0_i32, %arg0, %c0_i32_0 : i32, i32, i32
  }
  func.func @transform_7(%arg0: i32) -> (i32, i32, i32) {
    %c0_i32 = arith.constant 0 : i32
    %c0_i32_0 = arith.constant 0 : i32
    %c0_i32_1 = arith.constant 0 : i32
    return %c0_i32, %arg0, %c0_i32_0 : i32, i32, i32
  }
}

</mosaic_0001>

<llo_original>
// kernel: encoder_forward.1
$region0: #{encoder_forward.1}
  #allocation0 [shape = 'u32[]', space=smem, size = 0x4, offset = 0x4, fixed_abs, tag = 'smem constant byte address 0x4 - core index']
  #allocation1 [shape = 'u32[72,128]{1,0:T(1,128)}', space=vmem, size = 0x9000, scoped, tag = 'internal scratch']
  #allocation2 [shape = 'f32[8,40]{1,0:T(8,128)}', space=vmem, size = 0x1000, scoped, tag = 'scratch operand']
  #allocation3 [shape = 'f32[8,32]{1,0:T(8,128)}', space=vmem, size = 0x1000, scoped, tag = 'scratch operand']
  %s0 = inlined_call_operand.vmem [shape: f32[8,8,8], index: 0, kind: input, shape index: {}]
  %s1 = inlined_call_operand.vmem [shape: f32[8,8], index: 1, kind: input, shape index: {}]
  %s2 = inlined_call_operand.vmem [shape: f32[40,128], index: 2, kind: input, shape index: {}]
  %s3 = inlined_call_operand.vmem [shape: f32[1,128], index: 3, kind: input, shape index: {}]
  %s4 = inlined_call_operand.vmem [shape: f32[1,32], index: 4, kind: input, shape index: {}]
  %s5 = inlined_call_operand.vmem [shape: f32[1,32], index: 5, kind: input, shape index: {}]
  %s6 = inlined_call_operand.vmem [shape: f32[8,8,8], index: 6, kind: output, shape index: {0}]
  %s7 = inlined_call_operand.vmem [shape: f32[8,8,32], index: 7, kind: output, shape index: {1}]
  %8 = xla_tuple %s6, %s7
  %s9 = sld [smem:[#allocation0]]
  $region42: #{encoder_forward.1} parent=0
    _
  %s11 = ssub.s32 1, %s9
  %s12 = scalar_select 0, %s11, %s9
  // Predicated region
  $region2: #{encoder_forward.1} parent=0 // pred_check
    _
  $region3: #{encoder_forward.1} parent=0 // pred_check_branch
    %14 = sbr.rel (0) target = $region5
  $region4: #{encoder_forward.1} parent=0 // pred_region
    _
  $region5: #{encoder_forward.1} parent=0 // pred_fallthru
    _
  // Predicated region
  $region6: #{encoder_forward.1} parent=0 // pred_check
    _
  $region7: #{encoder_forward.1} parent=0 // pred_check_branch
    %16 = sbr.rel (0) target = $region9
  $region8: #{encoder_forward.1} parent=0 // pred_region
    _
  $region9: #{encoder_forward.1} parent=0 // pred_fallthru
    _
  // Predicated region
  $region10: #{encoder_forward.1} parent=0 // pred_check
    _
  $region11: #{encoder_forward.1} parent=0 // pred_check_branch
    %18 = sbr.rel (0) target = $region13
  $region12: #{encoder_forward.1} parent=0 // pred_region
    _
  $region13: #{encoder_forward.1} parent=0 // pred_fallthru
    _
  // Predicated region
  $region14: #{encoder_forward.1} parent=0 // pred_check
    _
  $region15: #{encoder_forward.1} parent=0 // pred_check_branch
    %20 = sbr.rel (0) target = $region17
  $region16: #{encoder_forward.1} parent=0 // pred_region
    _
  $region17: #{encoder_forward.1} parent=0 // pred_fallthru
    _
  // Predicated region
  $region18: #{encoder_forward.1} parent=0 // pred_check
    _
  $region19: #{encoder_forward.1} parent=0 // pred_check_branch
    %22 = sbr.rel (0) target = $region21
  $region20: #{encoder_forward.1} parent=0 // pred_region
    _
  $region21: #{encoder_forward.1} parent=0 // pred_fallthru
    _
  // Predicated region
  $region22: #{encoder_forward.1} parent=0 // pred_check
    _
  $region23: #{encoder_forward.1} parent=0 // pred_check_branch
    %24 = sbr.rel (0) target = $region25
  $region24: #{encoder_forward.1} parent=0 // pred_region
    _
  $region25: #{encoder_forward.1} parent=0 // pred_fallthru
    _
  %vm25 = vcmask 326656
  %26 = vst.msk [vmem:[#allocation2] sm:$0xff] %vm25, 0.0
  %vm27 = vcmask 261120
  %28 = vst.msk [vmem:[#allocation3] sm:$0xff] %vm27, 0.0
  %v29 = vld [vmem:[%s1] sm:$0xff]
  %v30 = vld [vmem:[%s2] sm:$0xff]
  %v31 = vld [vmem:[%s2 + $0x8] sm:$0xff]
  %v32 = vld [vmem:[%s2 + $0x10] sm:$0xff]
  %v33 = vld [vmem:[%s2 + $0x18] sm:$0xff]
  %v34 = vld [vmem:[%s2 + $0x20] sm:$0xff]
  %v35 = vld [vmem:[%s3] sm:$0x1]
  %v36 = vld [vmem:[%s4] sm:$0x1]
  %v37 = vld [vmem:[%s5] sm:$0x1]
  %v38 = vld [vmem:[#allocation2] sm:$0xff]
  %v39 = vld [vmem:[#allocation3] sm:$0xff]
  %v41 = vperm.slane %v36, 0
  %v43 = vmul.f32 %v38, %v41
  %v45 = vperm.slane %v37, 0
  %v47 = vmul.f32 %v39, %v45
  %v48 = vadd.f32 %v43, %v47
  %v49 = vsel %vm27, %v48, 0.0
  %50 = vadd.xlane.f32.xlu0 %v49
  %v51 = vpop.xlane.xlu0 %50
  %v52 = vadd.f32 %v29, %v51
  %vm53 = vcmask 64512
  %v54 = vsel %vm53, %v52, -inf
  %55 = vmax.xlane.f32.xlu0 %v54
  %v56 = vpop.xlane.xlu0 %55
  %v57 = vsub.f32 %v52, %v56
  %v58 = vmul.f32 %v57, 1.442695
  %v59 = vpow.pop %v58
  %v60 = vsel %vm53, %v59, 0.0
  %61 = vadd.xlane.f32.xlu0 %v60
  %v62 = vpop.xlane.xlu0 %61
  %v63 = vrcp.pop %v62
  %v64 = vmul.f32 %v59, %v63
  %v65 = vld [vmem:[%s0] sm:$0xff]
  %v66 = vmul.f32 %v64, %v65
  %68 = vrot.lane.b32.xlu0 %v66, 32
  %v69 = vpop.permute.xlu0 %68
  %vm71 = vcmask 326912
  %72 = vst.msk [vmem:[#allocation2] sm:$0xff] %vm71, %v69
  %v73 = vld [vmem:[#allocation2] sm:$0xff]
  %v75 = vperm.slane %v35, 0
  %v78 = vsel %vm25, %v73, 0
  %80 = vmatpush.msra.mxu0 0.0
  %81 = vmatpush.msra.mxu0 0.0
  %82 = vmatpush.msra.mxu0 0.0
  %83 = vmatpush.msra.mxu0 0.0
  %84 = vmatpush.msra.mxu0 0.0
  %85 = vmatpush.msra.mxu0 0.0
  %86 = vmatpush.msra.mxu0 0.0
  %87 = vmatpush.msra.mxu0 0.0
  %88 = vmatpush.msra.mxu0 0.0
  %89 = vmatpush.msra.mxu0 0.0
  %90 = vmatpush.msra.mxu0 0.0
  %91 = vmatpush.msra.mxu0 %v34
  %92 = vmatpush.msra.mxu0 %v33
  %93 = vmatpush.msra.mxu0 %v32
  %94 = vmatpush.msra.mxu0 %v31
  %95 = vmatpush.msra.mxu0 %v30
  %96 = vmatmul.f32.gmra.mxu0 %v78
  %v97 = vpop.f32.mrf.mxu0
  %v98 = vadd.f32 %v75, %v97
  %99 = vdwg.mxu0
  %v100 = vxor.u32 %v98, 2147483648
  %v101 = vmul.f32 %v100, 1.442695
  %v102 = vpow.pop %v101
  %v103 = vadd.f32 %v102, 1.0
  %v104 = vrcp.pop %v103
  %v105 = vmul.f32 %v103, %v104
  %v106 = vsub.f32 1.0, %v105
  %v107 = vmul.f32 %v104, %v106
  %v108 = vadd.f32 %v104, %v107
  %vm109 = vweird.f32 %v103
  %vm110 = vweird.f32 %v104
  %vm111 = vmor %vm109, %vm110
  %v112 = vsel %vm111, %v104, %v108
  %v113 = vand.u32 2147483647, %v103
  %vm114 = vcmp.eq.f32.partialorder %v113, 8.507059e+37
  %v115 = vand.u32 %v103, 2147483648
  %v116 = vor.u32 1.1754944e-38, %v115
  %v117 = vsel %vm114, %v116, %v112
  %v118 = vmul.f32 1.0, %v117
  %v119 = vtanh.pop %v98
  %121 = vrot.lane.b32.xlu0 %v39, 32
  %v122 = vpop.permute.xlu0 %121
  %v124 = vmul.f32 %v118, %v122
  %126 = vrot.lane.b32.xlu0 %v119, 64
  %v127 = vpop.permute.xlu0 %126
  %v129 = vmul.f32 %v118, %v127
  %131 = vrot.lane.b32.xlu0 %v129, 32
  %v132 = vpop.permute.xlu0 %131
  %v134 = vadd.f32 %v124, %v132
  %v135 = vtanh.pop %v134
  %137 = vrot.lane.b32.xlu0 %v135, 64
  %v138 = vpop.permute.xlu0 %137
  %v140 = vmul.f32 %v118, %v138
  %142 = vrot.lane.b32.xlu0 %v140, 32
  %v143 = vpop.permute.xlu0 %142
  %145 = vst.msk [vmem:[#allocation2] sm:$0xff] %vm27, %v143
  %147 = vrot.lane.b32.xlu0 %v134, 96
  %v148 = vpop.permute.xlu0 %147
  %150 = vst.msk [vmem:[#allocation3] sm:$0xff] %vm27, %v148
  %151 = vst.msk [vmem:[%s6] sm:$0xff] %vm53, %v66
  %152 = vst.msk [vmem:[%s7] sm:$0xff] %vm27, %v143
  %v153 = vld [vmem:[#allocation2] sm:$0xff]
  %v154 = vld [vmem:[#allocation3] sm:$0xff]
  %v155 = vmul.f32 %v153, %v41
  %v156 = vmul.f32 %v154, %v45
  %v157 = vadd.f32 %v155, %v156
  %v158 = vsel %vm27, %v157, 0.0
  %159 = vadd.xlane.f32.xlu0 %v158
  %v160 = vpop.xlane.xlu0 %159
  %v161 = vadd.f32 %v29, %v160
  %v162 = vsel %vm53, %v161, -inf
  %163 = vmax.xlane.f32.xlu0 %v162
  %v164 = vpop.xlane.xlu0 %163
  %v165 = vsub.f32 %v161, %v164
  %v166 = vmul.f32 %v165, 1.442695
  %v167 = vpow.pop %v166
  %v168 = vsel %vm53, %v167, 0.0
  %169 = vadd.xlane.f32.xlu0 %v168
  %v170 = vpop.xlane.xlu0 %169
  %v171 = vrcp.pop %v170
  %v172 = vmul.f32 %v167, %v171
  %s173 = scalar_lea.vmem %s0, 8
  %v174 = vld [vmem:[%s173] sm:$0xff]
  %v175 = vmul.f32 %v172, %v174
  %177 = vrot.lane.b32.xlu0 %v175, 32
  %v178 = vpop.permute.xlu0 %177
  %180 = vst.msk [vmem:[#allocation2] sm:$0xff] %vm71, %v178
  %v181 = vld [vmem:[#allocation2] sm:$0xff]
  %v183 = vsel %vm25, %v181, 0
  %185 = vmatpush.msra.mxu0 0.0
  %186 = vmatpush.msra.mxu0 0.0
  %187 = vmatpush.msra.mxu0 0.0
  %188 = vmatpush.msra.mxu0 0.0
  %189 = vmatpush.msra.mxu0 0.0
  %190 = vmatpush.msra.mxu0 0.0
  %191 = vmatpush.msra.mxu0 0.0
  %192 = vmatpush.msra.mxu0 0.0
  %193 = vmatpush.msra.mxu0 0.0
  %194 = vmatpush.msra.mxu0 0.0
  %195 = vmatpush.msra.mxu0 0.0
  %196 = vmatpush.msra.mxu0 %v34
  %197 = vmatpush.msra.mxu0 %v33
  %198 = vmatpush.msra.mxu0 %v32
  %199 = vmatpush.msra.mxu0 %v31
  %200 = vmatpush.msra.mxu0 %v30
  %201 = vmatmul.f32.gmra.mxu0 %v183
  %v202 = vpop.f32.mrf.mxu0
  %v203 = vadd.f32 %v75, %v202
  %204 = vdwg.mxu0
  %v205 = vxor.u32 %v203, 2147483648
  %v206 = vmul.f32 %v205, 1.442695
  %v207 = vpow.pop %v206
  %v208 = vadd.f32 %v207, 1.0
  %v209 = vrcp.pop %v208
  %v210 = vmul.f32 %v208, %v209
  %v211 = vsub.f32 1.0, %v210
  %v212 = vmul.f32 %v209, %v211
  %v213 = vadd.f32 %v209, %v212
  %vm214 = vweird.f32 %v208
  %vm215 = vweird.f32 %v209
  %vm216 = vmor %vm214, %vm215
  %v217 = vsel %vm216, %v209, %v213
  %v218 = vand.u32 2147483647, %v208
  %vm219 = vcmp.eq.f32.partialorder %v218, 8.507059e+37
  %v220 = vand.u32 %v208, 2147483648
  %v221 = vor.u32 1.1754944e-38, %v220
  %v222 = vsel %vm219, %v221, %v217
  %v223 = vmul.f32 1.0, %v222
  %v224 = vtanh.pop %v203
  %226 = vrot.lane.b32.xlu0 %v154, 32
  %v227 = vpop.permute.xlu0 %226
  %v229 = vmul.f32 %v223, %v227
  %231 = vrot.lane.b32.xlu0 %v224, 64
  %v232 = vpop.permute.xlu0 %231
  %v234 = vmul.f32 %v223, %v232
  %236 = vrot.lane.b32.xlu0 %v234, 32
  %v237 = vpop.permute.xlu0 %236
  %v239 = vadd.f32 %v229, %v237
  %v240 = vtanh.pop %v239
  %242 = vrot.lane.b32.xlu0 %v240, 64
  %v243 = vpop.permute.xlu0 %242
  %v245 = vmul.f32 %v223, %v243
  %247 = vrot.lane.b32.xlu0 %v245, 32
  %v248 = vpop.permute.xlu0 %247
  %250 = vst.msk [vmem:[#allocation2] sm:$0xff] %vm27, %v248
  %252 = vrot.lane.b32.xlu0 %v239, 96
  %v253 = vpop.permute.xlu0 %252
  %255 = vst.msk [vmem:[#allocation3] sm:$0xff] %vm27, %v253
  %s256 = scalar_lea.vmem %s6, 8
  %257 = vst.msk [vmem:[%s256] sm:$0xff] %vm53, %v175
  %s258 = scalar_lea.vmem %s7, 8
  %259 = vst.msk [vmem:[%s258] sm:$0xff] %vm27, %v248
  %v260 = vld [vmem:[#allocation2] sm:$0xff]
  %v261 = vld [vmem:[#allocation3] sm:$0xff]
  %v262 = vmul.f32 %v260, %v41
  %v263 = vmul.f32 %v261, %v45
  %v264 = vadd.f32 %v262, %v263
  %v265 = vsel %vm27, %v264, 0.0
  %266 = vadd.xlane.f32.xlu0 %v265
  %v267 = vpop.xlane.xlu0 %266
  %v268 = vadd.f32 %v29, %v267
  %v269 = vsel %vm53, %v268, -inf
  %270 = vmax.xlane.f32.xlu0 %v269
  %v271 = vpop.xlane.xlu0 %270
  %v272 = vsub.f32 %v268, %v271
  %v273 = vmul.f32 %v272, 1.442695
  %v274 = vpow.pop %v273
  %v275 = vsel %vm53, %v274, 0.0
  %276 = vadd.xlane.f32.xlu0 %v275
  %v277 = vpop.xlane.xlu0 %276
  %v278 = vrcp.pop %v277
  %v279 = vmul.f32 %v274, %v278
  %s280 = scalar_lea.vmem %s0, 16
  %v281 = vld [vmem:[%s280] sm:$0xff]
  %v282 = vmul.f32 %v279, %v281
  %284 = vrot.lane.b32.xlu0 %v282, 32
  %v285 = vpop.permute.xlu0 %284
  %287 = vst.msk [vmem:[#allocation2] sm:$0xff] %vm71, %v285
  %v288 = vld [vmem:[#allocation2] sm:$0xff]
  %v290 = vsel %vm25, %v288, 0
  %292 = vmatpush.msra.mxu0 0.0
  %293 = vmatpush.msra.mxu0 0.0
  %294 = vmatpush.msra.mxu0 0.0
  %295 = vmatpush.msra.mxu0 0.0
  %296 = vmatpush.msra.mxu0 0.0
  %297 = vmatpush.msra.mxu0 0.0
  %298 = vmatpush.msra.mxu0 0.0
  %299 = vmatpush.msra.mxu0 0.0
  %300 = vmatpush.msra.mxu0 0.0
  %301 = vmatpush.msra.mxu0 0.0
  %302 = vmatpush.msra.mxu0 0.0
  %303 = vmatpush.msra.mxu0 %v34
  %304 = vmatpush.msra.mxu0 %v33
  %305 = vmatpush.msra.mxu0 %v32
  %306 = vmatpush.msra.mxu0 %v31
  %307 = vmatpush.msra.mxu0 %v30
  %308 = vmatmul.f32.gmra.mxu0 %v290
  %v309 = vpop.f32.mrf.mxu0
  %v310 = vadd.f32 %v75, %v309
  %311 = vdwg.mxu0
  %v312 = vxor.u32 %v310, 2147483648
  %v313 = vmul.f32 %v312, 1.442695
  %v314 = vpow.pop %v313
  %v315 = vadd.f32 %v314, 1.0
  %v316 = vrcp.pop %v315
  %v317 = vmul.f32 %v315, %v316
  %v318 = vsub.f32 1.0, %v317
  %v319 = vmul.f32 %v316, %v318
  %v320 = vadd.f32 %v316, %v319
  %vm321 = vweird.f32 %v315
  %vm322 = vweird.f32 %v316
  %vm323 = vmor %vm321, %vm322
  %v324 = vsel %vm323, %v316, %v320
  %v325 = vand.u32 2147483647, %v315
  %vm326 = vcmp.eq.f32.partialorder %v325, 8.507059e+37
  %v327 = vand.u32 %v315, 2147483648
  %v328 = vor.u32 1.1754944e-38, %v327
  %v329 = vsel %vm326, %v328, %v324
  %v330 = vmul.f32 1.0, %v329
  %v331 = vtanh.pop %v310
  %333 = vrot.lane.b32.xlu0 %v261, 32
  %v334 = vpop.permute.xlu0 %333
  %v336 = vmul.f32 %v330, %v334
  %338 = vrot.lane.b32.xlu0 %v331, 64
  %v339 = vpop.permute.xlu0 %338
  %v341 = vmul.f32 %v330, %v339
  %343 = vrot.lane.b32.xlu0 %v341, 32
  %v344 = vpop.permute.xlu0 %343
  %v346 = vadd.f32 %v336, %v344
  %v347 = vtanh.pop %v346
  %349 = vrot.lane.b32.xlu0 %v347, 64
  %v350 = vpop.permute.xlu0 %349
  %v352 = vmul.f32 %v330, %v350
  %354 = vrot.lane.b32.xlu0 %v352, 32
  %v355 = vpop.permute.xlu0 %354
  %357 = vst.msk [vmem:[#allocation2] sm:$0xff] %vm27, %v355
  %359 = vrot.lane.b32.xlu0 %v346, 96
  %v360 = vpop.permute.xlu0 %359
  %362 = vst.msk [vmem:[#allocation3] sm:$0xff] %vm27, %v360
  %s363 = scalar_lea.vmem %s6, 16
  %364 = vst.msk [vmem:[%s363] sm:$0xff] %vm53, %v282
  %s365 = scalar_lea.vmem %s7, 16
  %366 = vst.msk [vmem:[%s365] sm:$0xff] %vm27, %v355
  %v367 = vld [vmem:[#allocation2] sm:$0xff]
  %v368 = vld [vmem:[#allocation3] sm:$0xff]
  %v369 = vmul.f32 %v367, %v41
  %v370 = vmul.f32 %v368, %v45
  %v371 = vadd.f32 %v369, %v370
  %v372 = vsel %vm27, %v371, 0.0
  %373 = vadd.xlane.f32.xlu0 %v372
  %v374 = vpop.xlane.xlu0 %373
  %v375 = vadd.f32 %v29, %v374
  %v376 = vsel %vm53, %v375, -inf
  %377 = vmax.xlane.f32.xlu0 %v376
  %v378 = vpop.xlane.xlu0 %377
  %v379 = vsub.f32 %v375, %v378
  %v380 = vmul.f32 %v379, 1.442695
  %v381 = vpow.pop %v380
  %v382 = vsel %vm53, %v381, 0.0
  %383 = vadd.xlane.f32.xlu0 %v382
  %v384 = vpop.xlane.xlu0 %383
  %v385 = vrcp.pop %v384
  %v386 = vmul.f32 %v381, %v385
  %s387 = scalar_lea.vmem %s0, 24
  %v388 = vld [vmem:[%s387] sm:$0xff]
  %v389 = vmul.f32 %v386, %v388
  %391 = vrot.lane.b32.xlu0 %v389, 32
  %v392 = vpop.permute.xlu0 %391
  %394 = vst.msk [vmem:[#allocation2] sm:$0xff] %vm71, %v392
  %v395 = vld [vmem:[#allocation2] sm:$0xff]
  %v397 = vsel %vm25, %v395, 0
  %399 = vmatpush.msra.mxu0 0.0
  %400 = vmatpush.msra.mxu0 0.0
  %401 = vmatpush.msra.mxu0 0.0
  %402 = vmatpush.msra.mxu0 0.0
  %403 = vmatpush.msra.mxu0 0.0
  %404 = vmatpush.msra.mxu0 0.0
  %405 = vmatpush.msra.mxu0 0.0
  %406 = vmatpush.msra.mxu0 0.0
  %407 = vmatpush.msra.mxu0 0.0
  %408 = vmatpush.msra.mxu0 0.0
  %409 = vmatpush.msra.mxu0 0.0
  %410 = vmatpush.msra.mxu0 %v34
  %411 = vmatpush.msra.mxu0 %v33
  %412 = vmatpush.msra.mxu0 %v32
  %413 = vmatpush.msra.mxu0 %v31
  %414 = vmatpush.msra.mxu0 %v30
  %415 = vmatmul.f32.gmra.mxu0 %v397
  %v416 = vpop.f32.mrf.mxu0
  %v417 = vadd.f32 %v75, %v416
  %418 = vdwg.mxu0
  %v419 = vxor.u32 %v417, 2147483648
  %v420 = vmul.f32 %v419, 1.442695
  %v421 = vpow.pop %v420
  %v422 = vadd.f32 %v421, 1.0
  %v423 = vrcp.pop %v422
  %v424 = vmul.f32 %v422, %v423
  %v425 = vsub.f32 1.0, %v424
  %v426 = vmul.f32 %v423, %v425
  %v427 = vadd.f32 %v423, %v426
  %vm428 = vweird.f32 %v422
  %vm429 = vweird.f32 %v423
  %vm430 = vmor %vm428, %vm429
  %v431 = vsel %vm430, %v423, %v427
  %v432 = vand.u32 2147483647, %v422
  %vm433 = vcmp.eq.f32.partialorder %v432, 8.507059e+37
  %v434 = vand.u32 %v422, 2147483648
  %v435 = vor.u32 1.1754944e-38, %v434
  %v436 = vsel %vm433, %v435, %v431
  %v437 = vmul.f32 1.0, %v436
  %v438 = vtanh.pop %v417
  %440 = vrot.lane.b32.xlu0 %v368, 32
  %v441 = vpop.permute.xlu0 %440
  %v443 = vmul.f32 %v437, %v441
  %445 = vrot.lane.b32.xlu0 %v438, 64
  %v446 = vpop.permute.xlu0 %445
  %v448 = vmul.f32 %v437, %v446
  %450 = vrot.lane.b32.xlu0 %v448, 32
  %v451 = vpop.permute.xlu0 %450
  %v453 = vadd.f32 %v443, %v451
  %v454 = vtanh.pop %v453
  %456 = vrot.lane.b32.xlu0 %v454, 64
  %v457 = vpop.permute.xlu0 %456
  %v459 = vmul.f32 %v437, %v457
  %461 = vrot.lane.b32.xlu0 %v459, 32
  %v462 = vpop.permute.xlu0 %461
  %464 = vst.msk [vmem:[#allocation2] sm:$0xff] %vm27, %v462
  %466 = vrot.lane.b32.xlu0 %v453, 96
  %v467 = vpop.permute.xlu0 %466
  %469 = vst.msk [vmem:[#allocation3] sm:$0xff] %vm27, %v467
  %s470 = scalar_lea.vmem %s6, 24
  %471 = vst.msk [vmem:[%s470] sm:$0xff] %vm53, %v389
  %s472 = scalar_lea.vmem %s7, 24
  %473 = vst.msk [vmem:[%s472] sm:$0xff] %vm27, %v462
  %v474 = vld [vmem:[#allocation2] sm:$0xff]
  %v475 = vld [vmem:[#allocation3] sm:$0xff]
  %v476 = vmul.f32 %v474, %v41
  %v477 = vmul.f32 %v475, %v45
  %v478 = vadd.f32 %v476, %v477
  %v479 = vsel %vm27, %v478, 0.0
  %480 = vadd.xlane.f32.xlu0 %v479
  %v481 = vpop.xlane.xlu0 %480
  %v482 = vadd.f32 %v29, %v481
  %v483 = vsel %vm53, %v482, -inf
  %484 = vmax.xlane.f32.xlu0 %v483
  %v485 = vpop.xlane.xlu0 %484
  %v486 = vsub.f32 %v482, %v485
  %v487 = vmul.f32 %v486, 1.442695
  %v488 = vpow.pop %v487
  %v489 = vsel %vm53, %v488, 0.0
  %490 = vadd.xlane.f32.xlu0 %v489
  %v491 = vpop.xlane.xlu0 %490
  %v492 = vrcp.pop %v491
  %v493 = vmul.f32 %v488, %v492
  %s494 = scalar_lea.vmem %s0, 32
  %v495 = vld [vmem:[%s494] sm:$0xff]
  %v496 = vmul.f32 %v493, %v495
  %498 = vrot.lane.b32.xlu0 %v496, 32
  %v499 = vpop.permute.xlu0 %498
  %501 = vst.msk [vmem:[#allocation2] sm:$0xff] %vm71, %v499
  %v502 = vld [vmem:[#allocation2] sm:$0xff]
  %v504 = vsel %vm25, %v502, 0
  %506 = vmatpush.msra.mxu0 0.0
  %507 = vmatpush.msra.mxu0 0.0
  %508 = vmatpush.msra.mxu0 0.0
  %509 = vmatpush.msra.mxu0 0.0
  %510 = vmatpush.msra.mxu0 0.0
  %511 = vmatpush.msra.mxu0 0.0
  %512 = vmatpush.msra.mxu0 0.0
  %513 = vmatpush.msra.mxu0 0.0
  %514 = vmatpush.msra.mxu0 0.0
  %515 = vmatpush.msra.mxu0 0.0
  %516 = vmatpush.msra.mxu0 0.0
  %517 = vmatpush.msra.mxu0 %v34
  %518 = vmatpush.msra.mxu0 %v33
  %519 = vmatpush.msra.mxu0 %v32
  %520 = vmatpush.msra.mxu0 %v31
  %521 = vmatpush.msra.mxu0 %v30
  %522 = vmatmul.f32.gmra.mxu0 %v504
  %v523 = vpop.f32.mrf.mxu0
  %v524 = vadd.f32 %v75, %v523
  %525 = vdwg.mxu0
  %v526 = vxor.u32 %v524, 2147483648
  %v527 = vmul.f32 %v526, 1.442695
  %v528 = vpow.pop %v527
  %v529 = vadd.f32 %v528, 1.0
  %v530 = vrcp.pop %v529
  %v531 = vmul.f32 %v529, %v530
  %v532 = vsub.f32 1.0, %v531
  %v533 = vmul.f32 %v530, %v532
  %v534 = vadd.f32 %v530, %v533
  %vm535 = vweird.f32 %v529
  %vm536 = vweird.f32 %v530
  %vm537 = vmor %vm535, %vm536
  %v538 = vsel %vm537, %v530, %v534
  %v539 = vand.u32 2147483647, %v529
  %vm540 = vcmp.eq.f32.partialorder %v539, 8.507059e+37
  %v541 = vand.u32 %v529, 2147483648
  %v542 = vor.u32 1.1754944e-38, %v541
  %v543 = vsel %vm540, %v542, %v538
  %v544 = vmul.f32 1.0, %v543
  %v545 = vtanh.pop %v524
  %547 = vrot.lane.b32.xlu0 %v475, 32
  %v548 = vpop.permute.xlu0 %547
  %v550 = vmul.f32 %v544, %v548
  %552 = vrot.lane.b32.xlu0 %v545, 64
  %v553 = vpop.permute.xlu0 %552
  %v555 = vmul.f32 %v544, %v553
  %557 = vrot.lane.b32.xlu0 %v555, 32
  %v558 = vpop.permute.xlu0 %557
  %v560 = vadd.f32 %v550, %v558
  %v561 = vtanh.pop %v560
  %563 = vrot.lane.b32.xlu0 %v561, 64
  %v564 = vpop.permute.xlu0 %563
  %v566 = vmul.f32 %v544, %v564
  %568 = vrot.lane.b32.xlu0 %v566, 32
  %v569 = vpop.permute.xlu0 %568
  %571 = vst.msk [vmem:[#allocation2] sm:$0xff] %vm27, %v569
  %573 = vrot.lane.b32.xlu0 %v560, 96
  %v574 = vpop.permute.xlu0 %573
  %576 = vst.msk [vmem:[#allocation3] sm:$0xff] %vm27, %v574
  %s577 = scalar_lea.vmem %s6, 32
  %578 = vst.msk [vmem:[%s577] sm:$0xff] %vm53, %v496
  %s579 = scalar_lea.vmem %s7, 32
  %580 = vst.msk [vmem:[%s579] sm:$0xff] %vm27, %v569
  %v581 = vld [vmem:[#allocation2] sm:$0xff]
  %v582 = vld [vmem:[#allocation3] sm:$0xff]
  %v583 = vmul.f32 %v581, %v41
  %v584 = vmul.f32 %v582, %v45
  %v585 = vadd.f32 %v583, %v584
  %v586 = vsel %vm27, %v585, 0.0
  %587 = vadd.xlane.f32.xlu0 %v586
  %v588 = vpop.xlane.xlu0 %587
  %v589 = vadd.f32 %v29, %v588
  %v590 = vsel %vm53, %v589, -inf
  %591 = vmax.xlane.f32.xlu0 %v590
  %v592 = vpop.xlane.xlu0 %591
  %v593 = vsub.f32 %v589, %v592
  %v594 = vmul.f32 %v593, 1.442695
  %v595 = vpow.pop %v594
  %v596 = vsel %vm53, %v595, 0.0
  %597 = vadd.xlane.f32.xlu0 %v596
  %v598 = vpop.xlane.xlu0 %597
  %v599 = vrcp.pop %v598
  %v600 = vmul.f32 %v595, %v599
  %s601 = scalar_lea.vmem %s0, 40
  %v602 = vld [vmem:[%s601] sm:$0xff]
  %v603 = vmul.f32 %v600, %v602
  %605 = vrot.lane.b32.xlu0 %v603, 32
  %v606 = vpop.permute.xlu0 %605
  %608 = vst.msk [vmem:[#allocation2] sm:$0xff] %vm71, %v606
  %v609 = vld [vmem:[#allocation2] sm:$0xff]
  %v611 = vsel %vm25, %v609, 0
  %613 = vmatpush.msra.mxu0 0.0
  %614 = vmatpush.msra.mxu0 0.0
  %615 = vmatpush.msra.mxu0 0.0
  %616 = vmatpush.msra.mxu0 0.0
  %617 = vmatpush.msra.mxu0 0.0
  %618 = vmatpush.msra.mxu0 0.0
  %619 = vmatpush.msra.mxu0 0.0
  %620 = vmatpush.msra.mxu0 0.0
  %621 = vmatpush.msra.mxu0 0.0
  %622 = vmatpush.msra.mxu0 0.0
  %623 = vmatpush.msra.mxu0 0.0
  %624 = vmatpush.msra.mxu0 %v34
  %625 = vmatpush.msra.mxu0 %v33
  %626 = vmatpush.msra.mxu0 %v32
  %627 = vmatpush.msra.mxu0 %v31
  %628 = vmatpush.msra.mxu0 %v30
  %629 = vmatmul.f32.gmra.mxu0 %v611
  %v630 = vpop.f32.mrf.mxu0
  %v631 = vadd.f32 %v75, %v630
  %632 = vdwg.mxu0
  %v633 = vxor.u32 %v631, 2147483648
  %v634 = vmul.f32 %v633, 1.442695
  %v635 = vpow.pop %v634
  %v636 = vadd.f32 %v635, 1.0
  %v637 = vrcp.pop %v636
  %v638 = vmul.f32 %v636, %v637
  %v639 = vsub.f32 1.0, %v638
  %v640 = vmul.f32 %v637, %v639
  %v641 = vadd.f32 %v637, %v640
  %vm642 = vweird.f32 %v636
  %vm643 = vweird.f32 %v637
  %vm644 = vmor %vm642, %vm643
  %v645 = vsel %vm644, %v637, %v641
  %v646 = vand.u32 2147483647, %v636
  %vm647 = vcmp.eq.f32.partialorder %v646, 8.507059e+37
  %v648 = vand.u32 %v636, 2147483648
  %v649 = vor.u32 1.1754944e-38, %v648
  %v650 = vsel %vm647, %v649, %v645
  %v651 = vmul.f32 1.0, %v650
  %v652 = vtanh.pop %v631
  %654 = vrot.lane.b32.xlu0 %v582, 32
  %v655 = vpop.permute.xlu0 %654
  %v657 = vmul.f32 %v651, %v655
  %659 = vrot.lane.b32.xlu0 %v652, 64
  %v660 = vpop.permute.xlu0 %659
  %v662 = vmul.f32 %v651, %v660
  %664 = vrot.lane.b32.xlu0 %v662, 32
  %v665 = vpop.permute.xlu0 %664
  %v667 = vadd.f32 %v657, %v665
  %v668 = vtanh.pop %v667
  %670 = vrot.lane.b32.xlu0 %v668, 64
  %v671 = vpop.permute.xlu0 %670
  %v673 = vmul.f32 %v651, %v671
  %675 = vrot.lane.b32.xlu0 %v673, 32
  %v676 = vpop.permute.xlu0 %675
  %678 = vst.msk [vmem:[#allocation2] sm:$0xff] %vm27, %v676
  %680 = vrot.lane.b32.xlu0 %v667, 96
  %v681 = vpop.permute.xlu0 %680
  %683 = vst.msk [vmem:[#allocation3] sm:$0xff] %vm27, %v681
  %s684 = scalar_lea.vmem %s6, 40
  %685 = vst.msk [vmem:[%s684] sm:$0xff] %vm53, %v603
  %s686 = scalar_lea.vmem %s7, 40
  %687 = vst.msk [vmem:[%s686] sm:$0xff] %vm27, %v676
  %v688 = vld [vmem:[#allocation2] sm:$0xff]
  %v689 = vld [vmem:[#allocation3] sm:$0xff]
  %v690 = vmul.f32 %v688, %v41
  %v691 = vmul.f32 %v689, %v45
  %v692 = vadd.f32 %v690, %v691
  %v693 = vsel %vm27, %v692, 0.0
  %694 = vadd.xlane.f32.xlu0 %v693
  %v695 = vpop.xlane.xlu0 %694
  %v696 = vadd.f32 %v29, %v695
  %v697 = vsel %vm53, %v696, -inf
  %698 = vmax.xlane.f32.xlu0 %v697
  %v699 = vpop.xlane.xlu0 %698
  %v700 = vsub.f32 %v696, %v699
  %v701 = vmul.f32 %v700, 1.442695
  %v702 = vpow.pop %v701
  %v703 = vsel %vm53, %v702, 0.0
  %704 = vadd.xlane.f32.xlu0 %v703
  %v705 = vpop.xlane.xlu0 %704
  %v706 = vrcp.pop %v705
  %v707 = vmul.f32 %v702, %v706
  %s708 = scalar_lea.vmem %s0, 48
  %v709 = vld [vmem:[%s708] sm:$0xff]
  %v710 = vmul.f32 %v707, %v709
  %712 = vrot.lane.b32.xlu0 %v710, 32
  %v713 = vpop.permute.xlu0 %712
  %715 = vst.msk [vmem:[#allocation2] sm:$0xff] %vm71, %v713
  %v716 = vld [vmem:[#allocation2] sm:$0xff]
  %v718 = vsel %vm25, %v716, 0
  %720 = vmatpush.msra.mxu0 0.0
  %721 = vmatpush.msra.mxu0 0.0
  %722 = vmatpush.msra.mxu0 0.0
  %723 = vmatpush.msra.mxu0 0.0
  %724 = vmatpush.msra.mxu0 0.0
  %725 = vmatpush.msra.mxu0 0.0
  %726 = vmatpush.msra.mxu0 0.0
  %727 = vmatpush.msra.mxu0 0.0
  %728 = vmatpush.msra.mxu0 0.0
  %729 = vmatpush.msra.mxu0 0.0
  %730 = vmatpush.msra.mxu0 0.0
  %731 = vmatpush.msra.mxu0 %v34
  %732 = vmatpush.msra.mxu0 %v33
  %733 = vmatpush.msra.mxu0 %v32
  %734 = vmatpush.msra.mxu0 %v31
  %735 = vmatpush.msra.mxu0 %v30
  %736 = vmatmul.f32.gmra.mxu0 %v718
  %v737 = vpop.f32.mrf.mxu0
  %v738 = vadd.f32 %v75, %v737
  %739 = vdwg.mxu0
  %v740 = vxor.u32 %v738, 2147483648
  %v741 = vmul.f32 %v740, 1.442695
  %v742 = vpow.pop %v741
  %v743 = vadd.f32 %v742, 1.0
  %v744 = vrcp.pop %v743
  %v745 = vmul.f32 %v743, %v744
  %v746 = vsub.f32 1.0, %v745
  %v747 = vmul.f32 %v744, %v746
  %v748 = vadd.f32 %v744, %v747
  %vm749 = vweird.f32 %v743
  %vm750 = vweird.f32 %v744
  %vm751 = vmor %vm749, %vm750
  %v752 = vsel %vm751, %v744, %v748
  %v753 = vand.u32 2147483647, %v743
  %vm754 = vcmp.eq.f32.partialorder %v753, 8.507059e+37
  %v755 = vand.u32 %v743, 2147483648
  %v756 = vor.u32 1.1754944e-38, %v755
  %v757 = vsel %vm754, %v756, %v752
  %v758 = vmul.f32 1.0, %v757
  %v759 = vtanh.pop %v738
  %761 = vrot.lane.b32.xlu0 %v689, 32
  %v762 = vpop.permute.xlu0 %761
  %v764 = vmul.f32 %v758, %v762
  %766 = vrot.lane.b32.xlu0 %v759, 64
  %v767 = vpop.permute.xlu0 %766
  %v769 = vmul.f32 %v758, %v767
  %771 = vrot.lane.b32.xlu0 %v769, 32
  %v772 = vpop.permute.xlu0 %771
  %v774 = vadd.f32 %v764, %v772
  %v775 = vtanh.pop %v774
  %777 = vrot.lane.b32.xlu0 %v775, 64
  %v778 = vpop.permute.xlu0 %777
  %v780 = vmul.f32 %v758, %v778
  %782 = vrot.lane.b32.xlu0 %v780, 32
  %v783 = vpop.permute.xlu0 %782
  %785 = vst.msk [vmem:[#allocation2] sm:$0xff] %vm27, %v783
  %787 = vrot.lane.b32.xlu0 %v774, 96
  %v788 = vpop.permute.xlu0 %787
  %790 = vst.msk [vmem:[#allocation3] sm:$0xff] %vm27, %v788
  %s791 = scalar_lea.vmem %s6, 48
  %792 = vst.msk [vmem:[%s791] sm:$0xff] %vm53, %v710
  %s793 = scalar_lea.vmem %s7, 48
  %794 = vst.msk [vmem:[%s793] sm:$0xff] %vm27, %v783
  %v795 = vld [vmem:[#allocation2] sm:$0xff]
  %v796 = vld [vmem:[#allocation3] sm:$0xff]
  %v797 = vmul.f32 %v795, %v41
  %v798 = vmul.f32 %v796, %v45
  %v799 = vadd.f32 %v797, %v798
  %v800 = vsel %vm27, %v799, 0.0
  %801 = vadd.xlane.f32.xlu0 %v800
  %v802 = vpop.xlane.xlu0 %801
  %v803 = vadd.f32 %v29, %v802
  %v804 = vsel %vm53, %v803, -inf
  %805 = vmax.xlane.f32.xlu0 %v804
  %v806 = vpop.xlane.xlu0 %805
  %v807 = vsub.f32 %v803, %v806
  %v808 = vmul.f32 %v807, 1.442695
  %v809 = vpow.pop %v808
  %v810 = vsel %vm53, %v809, 0.0
  %811 = vadd.xlane.f32.xlu0 %v810
  %v812 = vpop.xlane.xlu0 %811
  %v813 = vrcp.pop %v812
  %v814 = vmul.f32 %v809, %v813
  %s815 = scalar_lea.vmem %s0, 56
  %v816 = vld [vmem:[%s815] sm:$0xff]
  %v817 = vmul.f32 %v814, %v816
  %819 = vrot.lane.b32.xlu0 %v817, 32
  %v820 = vpop.permute.xlu0 %819
  %822 = vst.msk [vmem:[#allocation2] sm:$0xff] %vm71, %v820
  %v823 = vld [vmem:[#allocation2] sm:$0xff]
  %v825 = vsel %vm25, %v823, 0
  %827 = vmatpush.msra.mxu0 0.0
  %828 = vmatpush.msra.mxu0 0.0
  %829 = vmatpush.msra.mxu0 0.0
  %830 = vmatpush.msra.mxu0 0.0
  %831 = vmatpush.msra.mxu0 0.0
  %832 = vmatpush.msra.mxu0 0.0
  %833 = vmatpush.msra.mxu0 0.0
  %834 = vmatpush.msra.mxu0 0.0
  %835 = vmatpush.msra.mxu0 0.0
  %836 = vmatpush.msra.mxu0 0.0
  %837 = vmatpush.msra.mxu0 0.0
  %838 = vmatpush.msra.mxu0 %v34
  %839 = vmatpush.msra.mxu0 %v33
  %840 = vmatpush.msra.mxu0 %v32
  %841 = vmatpush.msra.mxu0 %v31
  %842 = vmatpush.msra.mxu0 %v30
  %843 = vmatmul.f32.gmra.mxu0 %v825
  %v844 = vpop.f32.mrf.mxu0
  %v845 = vadd.f32 %v75, %v844
  %846 = vdwg.mxu0
  %v847 = vxor.u32 %v845, 2147483648
  %v848 = vmul.f32 %v847, 1.442695
  %v849 = vpow.pop %v848
  %v850 = vadd.f32 %v849, 1.0
  %v851 = vrcp.pop %v850
  %v852 = vmul.f32 %v850, %v851
  %v853 = vsub.f32 1.0, %v852
  %v854 = vmul.f32 %v851, %v853
  %v855 = vadd.f32 %v851, %v854
  %vm856 = vweird.f32 %v850
  %vm857 = vweird.f32 %v851
  %vm858 = vmor %vm856, %vm857
  %v859 = vsel %vm858, %v851, %v855
  %v860 = vand.u32 2147483647, %v850
  %vm861 = vcmp.eq.f32.partialorder %v860, 8.507059e+37
  %v862 = vand.u32 %v850, 2147483648
  %v863 = vor.u32 1.1754944e-38, %v862
  %v864 = vsel %vm861, %v863, %v859
  %v865 = vmul.f32 1.0, %v864
  %v866 = vtanh.pop %v845
  %868 = vrot.lane.b32.xlu0 %v796, 32
  %v869 = vpop.permute.xlu0 %868
  %v871 = vmul.f32 %v865, %v869
  %873 = vrot.lane.b32.xlu0 %v866, 64
  %v874 = vpop.permute.xlu0 %873
  %v876 = vmul.f32 %v865, %v874
  %878 = vrot.lane.b32.xlu0 %v876, 32
  %v879 = vpop.permute.xlu0 %878
  %v881 = vadd.f32 %v871, %v879
  %v882 = vtanh.pop %v881
  %884 = vrot.lane.b32.xlu0 %v882, 64
  %v885 = vpop.permute.xlu0 %884
  %v887 = vmul.f32 %v865, %v885
  %889 = vrot.lane.b32.xlu0 %v887, 32
  %v890 = vpop.permute.xlu0 %889
  %892 = vst.msk [vmem:[#allocation2] sm:$0xff] %vm27, %v890
  %894 = vrot.lane.b32.xlu0 %v881, 96
  %v895 = vpop.permute.xlu0 %894
  %897 = vst.msk [vmem:[#allocation3] sm:$0xff] %vm27, %v895
  %s898 = scalar_lea.vmem %s6, 56
  %899 = vst.msk [vmem:[%s898] sm:$0xff] %vm53, %v817
  %s900 = scalar_lea.vmem %s7, 56
  %901 = vst.msk [vmem:[%s900] sm:$0xff] %vm27, %v890
  // Predicated region
  $region26: #{encoder_forward.1} parent=0 // pred_check
    _
  $region27: #{encoder_forward.1} parent=0 // pred_check_branch
    %903 = sbr.rel (0) target = $region29
  $region28: #{encoder_forward.1} parent=0 // pred_region
    _
  $region29: #{encoder_forward.1} parent=0 // pred_fallthru
    _
  // Predicated region
  $region30: #{encoder_forward.1} parent=0 // pred_check
    _
  $region31: #{encoder_forward.1} parent=0 // pred_check_branch
    %905 = sbr.rel (0) target = $region33
  $region32: #{encoder_forward.1} parent=0 // pred_region
    _
  $region33: #{encoder_forward.1} parent=0 // pred_fallthru
    _
  // Predicated region
  $region34: #{encoder_forward.1} parent=0 // pred_check
    _
  $region35: #{encoder_forward.1} parent=0 // pred_check_branch
    %907 = sbr.rel (0) target = $region37
  $region36: #{encoder_forward.1} parent=0 // pred_region
    _
  $region37: #{encoder_forward.1} parent=0 // pred_fallthru
    _
  // Predicated region
  $region38: #{encoder_forward.1} parent=0 // pred_check
    _
  $region39: #{encoder_forward.1} parent=0 // pred_check_branch
    %909 = sbr.rel (0) target = $region41
  $region40: #{encoder_forward.1} parent=0 // pred_region
    _
  $region41: #{encoder_forward.1} parent=0 // pred_fallthru
    _

</llo_original>
